<compile_context>
chip_gen: v7x
topology: tpu7x:2x2x1
jax: 0.10.0
libtpu: 0.0.40
codegen_flags: <defaults>
</compile_context>

<pallas_src>
import numpy as np

import jax
import jax.numpy as jnp
from jax.experimental import pallas as pl
from jax.experimental.pallas import tpu as pltpu

NEG_SLOPE = 0.01   # nn.LeakyReLU default
BN_EPS = 1e-5      # nn.BatchNorm1d default
BT = 8             # images per grid step (multiple of 8 -> sublane-tile aligned)


# ----------------------------------------------------------------------------
# Pallas kernels
# ----------------------------------------------------------------------------
def _conv_stack_kernel(xp_ref, kc_ref, b1_ref, w2_ref, b2_ref, wt2_ref,
                       mk_ref, sel_ref, bf1_ref, o_ref):
    """conv1 -> lrelu -> conv2 -> lrelu -> avgpool2 -> NCHW flatten -> fc1.

    Row layout is position-major: activation row = spatial_row * BT + image,
    so every spatial shift needed by conv2 is a static, sublane-aligned slice.
    """
    bt = o_ref.shape[0]
    rows14 = 14 * bt

    # conv1 (3x3, stride 2, pad 1): one GEMM over all 18 padded row positions
    # of the bt images.  Pad rows/cols stay exactly zero (zero input rows and
    # zero weight/bias columns), which implements conv2's spatial zero padding.
    acc1 = jnp.dot(xp_ref[...], kc_ref[...],
                   preferred_element_type=jnp.float32)            # [18*bt, 144]
    y1p = acc1 + b1_ref[...]
    y1p = jnp.where(y1p >= 0, y1p, NEG_SLOPE * y1p).astype(jnp.bfloat16)

    # conv2 (5x5, stride 1, pad 2): ONE wide GEMM (5 vertical taps stacked along
    # the 256-aligned output lanes), then 5 sublane-shifted slice-adds (VPU).
    yw = jnp.dot(y1p, w2_ref[...],
                 preferred_element_type=jnp.float32)              # [18*bt, 1280]
    acc2 = (yw[0 * bt:0 * bt + rows14,    0:224]
            + yw[1 * bt:1 * bt + rows14,  256:480]
            + yw[2 * bt:2 * bt + rows14,  512:736]
            + yw[3 * bt:3 * bt + rows14,  768:992]
            + yw[4 * bt:4 * bt + rows14, 1024:1248]
            + b2_ref[...])                                        # [14*bt, 224]
    y2 = jnp.where(acc2 >= 0, acc2, NEG_SLOPE * acc2).astype(jnp.bfloat16)

    # AvgPool2d(2) + channel-major (NCHW) flatten + fc1: horizontal pool and
    # flatten are folded into WT2 (7 pooled-row variants along lanes); the
    # vertical pool / row selection is a mask + sublane reduction; the final
    # 7-block lane sum is one tiny GEMM with a stacked-identity matrix.
    u = jnp.dot(y2, wt2_ref[...],
                preferred_element_type=jnp.float32)               # [14*bt, 224]
    s = jnp.sum(u.reshape(14, bt, 224) * mk_ref[...], axis=0)     # [bt, 224]
    h1 = jnp.dot(s, sel_ref[...],
                 preferred_element_type=jnp.float32) + bf1_ref[...]   # [bt, 32]

    o_ref[...] = h1   # single [bt, 32] store per tile


def _head_kernel(h_ref, g_ref, beta_ref, w2_ref, b2_ref, o_ref):
    """BatchNorm1d (batch stats) -> LeakyReLU -> Linear(32,1) -> Sigmoid."""
    h = h_ref[...]                                                # [N, 32]
    mean = jnp.mean(h, axis=0, keepdims=True)
    var = jnp.mean(jnp.square(h - mean), axis=0, keepdims=True)   # biased (PyTorch)
    hn = (h - mean) * jax.lax.rsqrt(var + BN_EPS)
    hn = hn * g_ref[...] + beta_ref[...]
    hn = jnp.where(hn >= 0, hn, NEG_SLOPE * hn)
    logit = jnp.dot(hn, w2_ref[...], preferred_element_type=jnp.float32)
    logit = logit + b2_ref[...]
    o_ref[...] = jax.nn.sigmoid(logit)


# ----------------------------------------------------------------------------
# Pallas wrappers
# ----------------------------------------------------------------------------
def conv_stack(x_nhw, consts):
    """x_nhw: [N, 28, 28] -> fc1 pre-activations [N, 32]."""
    bt = consts["B1TILE"].shape[0] // 18
    N = x_nhw.shape[0]
    Np = ((N + bt - 1) // bt) * bt
    G = Np // bt

    # Wrapper-side layout plumbing (tiny): build the 3 conv1 vertical-tap slabs,
    # add the 2-row conv2 zero pads, and go position-major within each tile.
    xp = jnp.pad(x_nhw.astype(jnp.float32), ((0, Np - N), (1, 0), (0, 0)))  # [Np,29,28]
    taps = [xp[:, i:i + 28:2, :] for i in range(3)]                         # 3x [Np,14,28]
    xc = jnp.concatenate(taps, axis=-1)                                     # [Np,14,84]
    xc = jnp.pad(xc, ((0, 0), (2, 2), (0, 0)))                              # [Np,18,84]
    xc = xc.reshape(G, bt, 18, 84).transpose(0, 2, 1, 3).reshape(G * 18 * bt, 84)
    xc = xc.astype(jnp.bfloat16)

    h1 = pl.pallas_call(
        _conv_stack_kernel,
        out_shape=jax.ShapeDtypeStruct((Np, 32), jnp.float32),
        grid=(G,),
        in_specs=[
            pl.BlockSpec((18 * bt, 84), lambda g: (g, 0)),    # images (position-major)
            pl.BlockSpec((84, 144), lambda g: (0, 0)),        # KC   conv1 folded weights
            pl.BlockSpec((18 * bt, 144), lambda g: (0, 0)),   # B1   conv1 bias tile
            pl.BlockSpec((144, 1280), lambda g: (0, 0)),      # W2W  conv2 wide weights
            pl.BlockSpec((1, 224), lambda g: (0, 0)),         # B2   conv2 bias row
            pl.BlockSpec((224, 224), lambda g: (0, 0)),       # WT2  pool+flatten+fc1 fold
            pl.BlockSpec((14, 1, 224), lambda g: (0, 0, 0)),  # MK   pooled-row mask
            pl.BlockSpec((224, 32), lambda g: (0, 0)),        # SEL  7-block lane sum
            pl.BlockSpec((1, 32), lambda g: (0, 0)),          # fc1 bias
        ],
        out_specs=pl.BlockSpec((bt, 32), lambda g: (g, 0)),
        compiler_params=pltpu.CompilerParams(
            dimension_semantics=("parallel",)),               # v7x: shard over 2 TCs
    )(xc, consts["KC"], consts["B1TILE"], consts["W2W"], consts["B2ROW"],
      consts["WT2"], consts["MK3"], consts["SEL"], consts["BF1"])
    return h1[:N]


def mlp_head(h1, bn_g, bn_b, fc2_w, fc2_b):
    """h1: [N, 32] fc1 pre-activations -> sigmoid output [N, 1]."""
    N = h1.shape[0]
    return pl.pallas_call(
        _head_kernel,
        out_shape=jax.ShapeDtypeStruct((N, 1), jnp.float32),
    )(h1, bn_g.reshape(1, 32), bn_b.reshape(1, 32),
      fc2_w.T.reshape(32, 1), fc2_b.reshape(1, 1))


# ----------------------------------------------------------------------------
# One-time host-side weight preparation: folds im2col, padding, pooling and
# the NCHW flatten into dense GEMM operands (bf16 for the MXU operands).
# ----------------------------------------------------------------------------
def prepare_consts(params, bt=BT):
    w1 = np.asarray(params["conv1_w"], np.float32)   # [8,1,3,3]
    b1 = np.asarray(params["conv1_b"], np.float32)   # [8]
    w2 = np.asarray(params["conv2_w"], np.float32)   # [16,8,5,5]
    b2 = np.asarray(params["conv2_b"], np.float32)   # [16]
    W1 = np.asarray(params["fc1_w"], np.float32)     # [32,784]
    bf1 = np.asarray(params["fc1_b"], np.float32)    # [32]

    # conv1: acc1[p*bt+b, q*8+co] = sum_{i,c} xprep[p*bt+b, i*28+c] * KC[i*28+c, q*8+co]
    #   with c = 2*(q-2)+j-1 (q = padded col position, interior q in [2,16)).
    KC = np.zeros((84, 144), np.float32)
    for i in range(3):
        for q in range(2, 16):
            ow = q - 2
            for j in range(3):
                c = 2 * ow + j - 1
                if 0 <= c < 28:
                    KC[i * 28 + c, q * 8:(q + 1) * 8] = w1[:, 0, i, j]

    # conv1 bias: interior rows/cols only, replicated position-major over bt images.
    B1pat = np.zeros((18, 144), np.float32)
    for q in range(2, 16):
        B1pat[2:16, q * 8:(q + 1) * 8] = b1
    B1TILE = np.repeat(B1pat, bt, axis=0)            # [bt*18, 144]

    # conv2: Ywide[., di*256 + ow2*16 + d] = sum_{q,c} y1p[., q*8+c] * w2[d,c,di,q-ow2]
    # (5 vertical taps di stacked along 256-lane-aligned output blocks).
    W2W = np.zeros((144, 5 * 256), np.float32)
    for di in range(5):
        for ow2 in range(14):
            for dj in range(5):
                q = ow2 + dj
                W2W[q * 8:(q + 1) * 8,
                    di * 256 + ow2 * 16: di * 256 + (ow2 + 1) * 16] = w2[:, :, di, dj].T
    B2ROW = np.tile(b2, 14).reshape(1, 224)

    # AvgPool2d(2) + NCHW flatten + fc1 weight (7 pooled-row variants along lanes):
    # WT2[ow2*16+d, ph*32+m] = 0.25 * fc1_w[m, d*49 + ph*7 + ow2//2].
    WT2 = np.zeros((224, 224), np.float32)
    for ow2 in range(14):
        pw = ow2 // 2
        for d in range(16):
            for ph in range(7):
                WT2[ow2 * 16 + d, ph * 32:(ph + 1) * 32] = 0.25 * W1[:, d * 49 + ph * 7 + pw]

    MK3 = np.zeros((14, 1, 224), np.float32)         # keep only ph == oh2 // 2
    for oh2 in range(14):
        ph = oh2 // 2
        MK3[oh2, 0, ph * 32:(ph + 1) * 32] = 1.0
    SEL = np.zeros((224, 32), np.float32)            # sum the 7 ph lane blocks
    for ph in range(7):
        SEL[ph * 32:(ph + 1) * 32, :] = np.eye(32, dtype=np.float32)

    return dict(
        KC=jnp.asarray(KC, jnp.bfloat16),
        B1TILE=jnp.asarray(B1TILE, jnp.float32),
        W2W=jnp.asarray(W2W, jnp.bfloat16),
        B2ROW=jnp.asarray(B2ROW, jnp.float32),
        WT2=jnp.asarray(WT2, jnp.bfloat16),
        MK3=jnp.asarray(MK3, jnp.float32),
        SEL=jnp.asarray(SEL, jnp.float32),
        BF1=jnp.asarray(bf1.reshape(1, 32), jnp.float32),
    )


# ----------------------------------------------------------------------------
# Full forward pass of Disc
# ----------------------------------------------------------------------------
def disc_forward(x_nchw, params, consts=None):
    if consts is None:
        consts = prepare_consts(params)
    assert x_nchw.shape[1:] == (1, 28, 28)
    x = x_nchw.astype(jnp.float32)[:, 0, :, :]        # [N, 28, 28]
    h1 = conv_stack(x, consts)                        # [N, 32] fc1 pre-activations
    return mlp_head(h1, params["bn_gamma"], params["bn_beta"],
                    params["fc2_w"], params["fc2_b"])


# ----------------------------------------------------------------------------
# Pure-JAX reference (mirrors the PyTorch module) for a correctness check
# ----------------------------------------------------------------------------
def disc_reference(x_nchw, params):
    hp = jax.lax.Precision.HIGHEST
    x = x_nchw.astype(jnp.float32)
    y = jax.lax.conv_general_dilated(
        x, params["conv1_w"], window_strides=(2, 2), padding=((1, 1), (1, 1)),
        dimension_numbers=("NCHW", "OIHW", "NCHW"), precision=hp)
    y = y + params["conv1_b"].reshape(1, 8, 1, 1)
    y = jnp.where(y >= 0, y, NEG_SLOPE * y)
    y = jax.lax.conv_general_dilated(
        y, params["conv2_w"], window_strides=(1, 1), padding=((2, 2), (2, 2)),
        dimension_numbers=("NCHW", "OIHW", "NCHW"), precision=hp)
    y = y + params["conv2_b"].reshape(1, 16, 1, 1)
    y = jnp.where(y >= 0, y, NEG_SLOPE * y)
    N = y.shape[0]
    y = y.reshape(N, 16, 7, 2, 7, 2).mean(axis=(3, 5))    # AvgPool2d(2)
    flat = y.reshape(N, 16 * 7 * 7)                       # NCHW flatten
    h = jnp.dot(flat, params["fc1_w"].T, precision=hp) + params["fc1_b"]
    mean = h.mean(axis=0, keepdims=True)
    var = jnp.square(h - mean).mean(axis=0, keepdims=True)
    hn = (h - mean) * jax.lax.rsqrt(var + BN_EPS)
    hn = hn * params["bn_gamma"] + params["bn_beta"]
    hn = jnp.where(hn >= 0, hn, NEG_SLOPE * hn)
    logit = jnp.dot(hn, params["fc2_w"].T, precision=hp) + params["fc2_b"]
    return jax.nn.sigmoid(logit), h


# ----------------------------------------------------------------------------
# Deterministic synthetic parameters (shapes from Disc.__init__)
# ----------------------------------------------------------------------------
def init_params(key):
    ks = jax.random.split(key, 8)

    def uni(k, shape, fan_in):
        bound = 1.0 / float(fan_in) ** 0.5
        return jax.random.uniform(k, shape, jnp.float32, -bound, bound)

    return {
        "conv1_w": uni(ks[0], (8, 1, 3, 3), 1 * 3 * 3),
        "conv1_b": uni(ks[1], (8,), 1 * 3 * 3),
        "conv2_w": uni(ks[2], (16, 8, 5, 5), 8 * 5 * 5),
        "conv2_b": uni(ks[3], (16,), 8 * 5 * 5),
        "fc1_w":   uni(ks[4], (32, 16 * 7 * 7), 16 * 7 * 7),
        "fc1_b":   uni(ks[5], (32,), 16 * 7 * 7),
        "bn_gamma": jnp.ones((32,), jnp.float32),   # PyTorch BatchNorm1d defaults
        "bn_beta":  jnp.zeros((32,), jnp.float32),
        "fc2_w":   uni(ks[6], (1, 32), 32),
        "fc2_b":   uni(ks[7], (1,), 32),
    }


if __name__ == "__main__":
    key = jax.random.PRNGKey(0)
    kx, kp = jax.random.split(key)
    params = init_params(kp)
    consts = prepare_consts(params)
    # Linear(16*7*7, 32) pins spatial size to 28x28 (MNIST-like); batch of 16
    # gives two grid steps of the fused conv kernel (both v7x TensorCores used).
    x = jax.random.normal(kx, (16, 1, 28, 28), jnp.float32)

    out = disc_forward(x, params, consts)
    out = jax.block_until_ready(out)
    assert out.shape == (16, 1)
    assert bool(jnp.all((out >= 0.0) & (out <= 1.0)))

    # Correctness check against a pure-JAX reference of the PyTorch module
    # (bf16 MXU operands -> slightly loosened tolerances).
    h1 = jax.block_until_ready(conv_stack(x.astype(jnp.float32)[:, 0, :, :], consts))
    ref_out, ref_h1 = disc_reference(x, params)
    np.testing.assert_allclose(np.asarray(h1), np.asarray(ref_h1), atol=3e-2, rtol=3e-2)
    np.testing.assert_allclose(np.asarray(out), np.asarray(ref_out), atol=2e-2, rtol=0)

    print("KERNEL_OK")
</pallas_src>

<mosaic_0001>
module attributes {stable_mosaic.version = 11 : i64} {
  func.func @_conv_stack_kernel(%arg0: i32, %arg1: memref<144x84xbf16, #tpu.memory_space<vmem>>, %arg2: memref<84x144xbf16, #tpu.memory_space<vmem>>, %arg3: memref<144x144xf32, #tpu.memory_space<vmem>>, %arg4: memref<144x1280xbf16, #tpu.memory_space<vmem>>, %arg5: memref<1x224xf32, #tpu.memory_space<vmem>>, %arg6: memref<224x224xbf16, #tpu.memory_space<vmem>>, %arg7: memref<14x1x224xf32, #tpu.memory_space<vmem>>, %arg8: memref<224x32xf32, #tpu.memory_space<vmem>>, %arg9: memref<1x32xf32, #tpu.memory_space<vmem>>, %arg10: memref<8x32xf32, #tpu.memory_space<vmem>>) attributes {dimension_semantics = [#tpu.dimension_semantics<parallel>], iteration_bounds = array<i64: 2>, scalar_prefetch = 0 : i64, scratch_operands = 0 : i64, tpu.core_type = #tpu.core_type<tc>, window_params = [{transform_indices = @transform_0, window_bounds = array<i64: 144, 84>}, {pipeline_mode = #tpu.pipeline_mode<synchronous>, transform_indices = @transform_1, window_bounds = array<i64: 84, 144>}, {pipeline_mode = #tpu.pipeline_mode<synchronous>, transform_indices = @transform_2, window_bounds = array<i64: 144, 144>}, {pipeline_mode = #tpu.pipeline_mode<synchronous>, transform_indices = @transform_3, window_bounds = array<i64: 144, 1280>}, {pipeline_mode = #tpu.pipeline_mode<synchronous>, transform_indices = @transform_4, window_bounds = array<i64: 1, 224>}, {pipeline_mode = #tpu.pipeline_mode<synchronous>, transform_indices = @transform_5, window_bounds = array<i64: 224, 224>}, {pipeline_mode = #tpu.pipeline_mode<synchronous>, transform_indices = @transform_6, window_bounds = array<i64: 14, 1, 224>}, {pipeline_mode = #tpu.pipeline_mode<synchronous>, transform_indices = @transform_7, window_bounds = array<i64: 224, 32>}, {pipeline_mode = #tpu.pipeline_mode<synchronous>, transform_indices = @transform_8, window_bounds = array<i64: 1, 32>}, {transform_indices = @transform_9, window_bounds = array<i64: 8, 32>}]} {
    %c0 = arith.constant 0 : index
    %c0_0 = arith.constant 0 : index
    %0 = vector.load %arg1[%c0, %c0_0] : memref<144x84xbf16, #tpu.memory_space<vmem>>, vector<144x84xbf16>
    %c0_1 = arith.constant 0 : index
    %c0_2 = arith.constant 0 : index
    %1 = vector.load %arg2[%c0_1, %c0_2] : memref<84x144xbf16, #tpu.memory_space<vmem>>, vector<84x144xbf16>
    %cst = arith.constant dense<0.000000e+00> : vector<144x144xf32>
    %2 = tpu.matmul %0, %1, %cst {dimension_numbers = #tpu.dot_dimension_numbers<[1], [0], [0], [1], [0, 0, 1, 1], [], []>} : vector<144x84xbf16>, vector<84x144xbf16>, vector<144x144xf32> -> vector<144x144xf32>
    %c0_3 = arith.constant 0 : index
    %c0_4 = arith.constant 0 : index
    %3 = vector.load %arg3[%c0_3, %c0_4] : memref<144x144xf32, #tpu.memory_space<vmem>>, vector<144x144xf32>
    %4 = arith.addf %2, %3 : vector<144x144xf32>
    %cst_5 = arith.constant 0.000000e+00 : f32
    %5 = vector.broadcast %cst_5 : f32 to vector<144x144xf32>
    %6 = arith.cmpf oge, %4, %5 : vector<144x144xf32>
    %cst_6 = arith.constant 0.00999999977 : f32
    %7 = vector.broadcast %cst_6 : f32 to vector<144x144xf32>
    %8 = arith.mulf %7, %4 : vector<144x144xf32>
    %9 = arith.select %6, %4, %8 : vector<144x144xi1>, vector<144x144xf32>
    %10 = arith.truncf %9 : vector<144x144xf32> to vector<144x144xbf16>
    %c0_7 = arith.constant 0 : index
    %c0_8 = arith.constant 0 : index
    %11 = vector.load %arg4[%c0_7, %c0_8] : memref<144x1280xbf16, #tpu.memory_space<vmem>>, vector<144x1280xbf16>
    %cst_9 = arith.constant dense<0.000000e+00> : vector<144x1280xf32>
    %12 = tpu.matmul %10, %11, %cst_9 {dimension_numbers = #tpu.dot_dimension_numbers<[1], [0], [0], [1], [0, 0, 1, 1], [], []>} : vector<144x144xbf16>, vector<144x1280xbf16>, vector<144x1280xf32> -> vector<144x1280xf32>
    %13 = vector.extract_strided_slice %12 {offsets = [0, 0], sizes = [112, 224], strides = [1, 1]} : vector<144x1280xf32> to vector<112x224xf32>
    %14 = vector.extract_strided_slice %12 {offsets = [8, 256], sizes = [112, 224], strides = [1, 1]} : vector<144x1280xf32> to vector<112x224xf32>
    %15 = arith.addf %13, %14 : vector<112x224xf32>
    %16 = vector.extract_strided_slice %12 {offsets = [16, 512], sizes = [112, 224], strides = [1, 1]} : vector<144x1280xf32> to vector<112x224xf32>
    %17 = arith.addf %15, %16 : vector<112x224xf32>
    %18 = vector.extract_strided_slice %12 {offsets = [24, 768], sizes = [112, 224], strides = [1, 1]} : vector<144x1280xf32> to vector<112x224xf32>
    %19 = arith.addf %17, %18 : vector<112x224xf32>
    %20 = vector.extract_strided_slice %12 {offsets = [32, 1024], sizes = [112, 224], strides = [1, 1]} : vector<144x1280xf32> to vector<112x224xf32>
    %21 = arith.addf %19, %20 : vector<112x224xf32>
    %c0_10 = arith.constant 0 : index
    %c0_11 = arith.constant 0 : index
    %22 = vector.load %arg5[%c0_10, %c0_11] : memref<1x224xf32, #tpu.memory_space<vmem>>, vector<1x224xf32>
    %23 = vector.broadcast %22 : vector<1x224xf32> to vector<112x224xf32>
    %24 = arith.addf %21, %23 : vector<112x224xf32>
    %cst_12 = arith.constant 0.000000e+00 : f32
    %25 = vector.broadcast %cst_12 : f32 to vector<112x224xf32>
    %26 = arith.cmpf oge, %24, %25 : vector<112x224xf32>
    %cst_13 = arith.constant 0.00999999977 : f32
    %27 = vector.broadcast %cst_13 : f32 to vector<112x224xf32>
    %28 = arith.mulf %27, %24 : vector<112x224xf32>
    %29 = arith.select %26, %24, %28 : vector<112x224xi1>, vector<112x224xf32>
    %30 = arith.truncf %29 : vector<112x224xf32> to vector<112x224xbf16>
    %c0_14 = arith.constant 0 : index
    %c0_15 = arith.constant 0 : index
    %31 = vector.load %arg6[%c0_14, %c0_15] : memref<224x224xbf16, #tpu.memory_space<vmem>>, vector<224x224xbf16>
    %cst_16 = arith.constant dense<0.000000e+00> : vector<112x224xf32>
    %32 = tpu.matmul %30, %31, %cst_16 {dimension_numbers = #tpu.dot_dimension_numbers<[1], [0], [0], [1], [0, 0, 1, 1], [], []>} : vector<112x224xbf16>, vector<224x224xbf16>, vector<112x224xf32> -> vector<112x224xf32>
    %33 = vector.shape_cast %32 : vector<112x224xf32> to vector<14x8x224xf32>
    %c0_17 = arith.constant 0 : index
    %c0_18 = arith.constant 0 : index
    %c0_19 = arith.constant 0 : index
    %34 = vector.load %arg7[%c0_17, %c0_18, %c0_19] : memref<14x1x224xf32, #tpu.memory_space<vmem>>, vector<14x1x224xf32>
    %35 = vector.broadcast %34 : vector<14x1x224xf32> to vector<14x8x224xf32>
    %36 = arith.mulf %33, %35 : vector<14x8x224xf32>
    %cst_20 = arith.constant dense<0.000000e+00> : vector<8x224xf32>
    %37 = vector.multi_reduction <add>, %36, %cst_20 [0] : vector<14x8x224xf32> to vector<8x224xf32>
    %c0_21 = arith.constant 0 : index
    %c0_22 = arith.constant 0 : index
    %38 = vector.load %arg8[%c0_21, %c0_22] : memref<224x32xf32, #tpu.memory_space<vmem>>, vector<224x32xf32>
    %cst_23 = arith.constant dense<0.000000e+00> : vector<8x32xf32>
    %39 = tpu.matmul %37, %38, %cst_23 {dimension_numbers = #tpu.dot_dimension_numbers<[1], [0], [0], [1], [0, 0, 1, 1], [], []>} : vector<8x224xf32>, vector<224x32xf32>, vector<8x32xf32> -> vector<8x32xf32>
    %c0_24 = arith.constant 0 : index
    %c0_25 = arith.constant 0 : index
    %40 = vector.load %arg9[%c0_24, %c0_25] : memref<1x32xf32, #tpu.memory_space<vmem>>, vector<1x32xf32>
    %41 = vector.broadcast %40 : vector<1x32xf32> to vector<8x32xf32>
    %42 = arith.addf %39, %41 : vector<8x32xf32>
    %c0_26 = arith.constant 0 : index
    %c0_27 = arith.constant 0 : index
    %43 = vector.load %arg10[%c0_26, %c0_27] : memref<8x32xf32, #tpu.memory_space<vmem>>, vector<8x32xf32>
    tpu.vector_store %arg10[%c0_26, %c0_27], %42 {strides = array<i32>} : memref<8x32xf32, #tpu.memory_space<vmem>>, vector<8x32xf32>,
    return
  }
  func.func @transform_0(%arg0: i32) -> (i32, i32) {
    %c0_i32 = arith.constant 0 : i32
    %c0_i32_0 = arith.constant 0 : i32
    return %arg0, %c0_i32 : i32, i32
  }
  func.func @transform_1(%arg0: i32) -> (i32, i32) {
    %c0_i32 = arith.constant 0 : i32
    %c0_i32_0 = arith.constant 0 : i32
    %c0_i32_1 = arith.constant 0 : i32
    return %c0_i32, %c0_i32_0 : i32, i32
  }
  func.func @transform_2(%arg0: i32) -> (i32, i32) {
    %c0_i32 = arith.constant 0 : i32
    %c0_i32_0 = arith.constant 0 : i32
    %c0_i32_1 = arith.constant 0 : i32
    return %c0_i32, %c0_i32_0 : i32, i32
  }
  func.func @transform_3(%arg0: i32) -> (i32, i32) {
    %c0_i32 = arith.constant 0 : i32
    %c0_i32_0 = arith.constant 0 : i32
    %c0_i32_1 = arith.constant 0 : i32
    return %c0_i32, %c0_i32_0 : i32, i32
  }
  func.func @transform_4(%arg0: i32) -> (i32, i32) {
    %c0_i32 = arith.constant 0 : i32
    %c0_i32_0 = arith.constant 0 : i32
    %c0_i32_1 = arith.constant 0 : i32
    return %c0_i32, %c0_i32_0 : i32, i32
  }
  func.func @transform_5(%arg0: i32) -> (i32, i32) {
    %c0_i32 = arith.constant 0 : i32
    %c0_i32_0 = arith.constant 0 : i32
    %c0_i32_1 = arith.constant 0 : i32
    return %c0_i32, %c0_i32_0 : i32, i32
  }
  func.func @transform_6(%arg0: i32) -> (i32, i32, i32) {
    %c0_i32 = arith.constant 0 : i32
    %c0_i32_0 = arith.constant 0 : i32
    %c0_i32_1 = arith.constant 0 : i32
    %c0_i32_2 = arith.constant 0 : i32
    return %c0_i32, %c0_i32_0, %c0_i32_1 : i32, i32, i32
  }
  func.func @transform_7(%arg0: i32) -> (i32, i32) {
    %c0_i32 = arith.constant 0 : i32
    %c0_i32_0 = arith.constant 0 : i32
    %c0_i32_1 = arith.constant 0 : i32
    return %c0_i32, %c0_i32_0 : i32, i32
  }
  func.func @transform_8(%arg0: i32) -> (i32, i32) {
    %c0_i32 = arith.constant 0 : i32
    %c0_i32_0 = arith.constant 0 : i32
    %c0_i32_1 = arith.constant 0 : i32
    return %c0_i32, %c0_i32_0 : i32, i32
  }
  func.func @transform_9(%arg0: i32) -> (i32, i32) {
    %c0_i32 = arith.constant 0 : i32
    %c0_i32_0 = arith.constant 0 : i32
    return %arg0, %c0_i32 : i32, i32
  }
}

</mosaic_0001>

<llo_original>
// kernel: tpu_custom_call.1
$region0: #{tpu_custom_call.1}
  #allocation0 [shape = 'u32[]', space=smem, size = 0x4, offset = 0x4, fixed_abs, tag = 'smem constant byte address 0x4 - core index']
  #allocation1 [shape = 'u32[144,128]{1,0:T(1,128)}', space=vmem, size = 0x12000, scoped, tag = 'internal scratch']
  %s0 = inlined_call_operand.vmem [shape: bf16[288,84], index: 0, kind: input, shape index: {}]
  %s1 = inlined_call_operand.vmem [shape: bf16[84,144], index: 1, kind: input, shape index: {}]
  %s2 = inlined_call_operand.hbm [shape: f32[144,144], index: 2, kind: input, shape index: {}]
  %s3 = inlined_call_operand.vmem [shape: bf16[144,1280], index: 3, kind: input, shape index: {}]
  %s4 = inlined_call_operand.vmem [shape: f32[1,224], index: 4, kind: input, shape index: {}]
  %s5 = inlined_call_operand.hbm [shape: bf16[224,224], index: 5, kind: input, shape index: {}]
  %s6 = inlined_call_operand.hbm [shape: f32[14,1,224], index: 6, kind: input, shape index: {}]
  %s7 = inlined_call_operand.vmem [shape: f32[224,32], index: 7, kind: input, shape index: {}]
  %s8 = inlined_call_operand.vmem [shape: f32[1,32], index: 8, kind: input, shape index: {}]
  %s9 = inlined_call_operand.hbm [shape: f32[16,32], index: 9, kind: output, shape index: {}]
  %s10 = sld [smem:[#allocation0]]
  $region81: #{tpu_custom_call.1} parent=0
    _
  %s12 = ssub.s32 1, %s10
  %s13 = scalar_select 0, %s12, %s10
  $region1: #{tpu_custom_call.1} parent=0
    #allocation2 [shape = 'u8[147456]{0}', space=vmem, size = 0x24000, scoped, tag = 'input window, operand 2, single buffered']
    #allocation3 [shape = 's32[2]{0}', space=sflag, size = 0x8, scoped, tag = 'scoped memory for tpu_custom_call.1']
    #allocation4 [shape = 's32[2]{0}', space=sflag, size = 0x8, scoped, tag = 'scoped memory for tpu_custom_call.1']
    #allocation5 [shape = 'u8[114688]{0}', space=vmem, size = 0x1c000, scoped, tag = 'input window, operand 5, single buffered']
    #allocation6 [shape = 's32[1]{0}', space=sflag, size = 0x4, scoped, tag = 'scoped memory for tpu_custom_call.1']
    #allocation7 [shape = 'u8[14336]{0}', space=vmem, size = 0x3800, scoped, tag = 'input window, operand 6, single buffered']
    #allocation8 [shape = 'u8[8192]{0}', space=vmem, size = 0x2000, scoped, tag = 'output window, operand 0']
    %14 = vsyncpa [#allocation3], 0
    %15 = vsyncpa [#allocation6], 0
    %16 = vsyncpa [#allocation4], 0
    %s17 = scalar_lea.sflag [#allocation4], 1
    %18 = vsyncpa %s17, 0
    loop: start=0, step=1, limit=4
    $region2: #{tpu_custom_call.1} parent=1 // loop_pre_header
      _
    $region3: #{tpu_custom_call.1} parent=1 // loop_header
      %s20 = sphi 0, %s24
      %p21 = scmp.ge.s32.totalorder %s20, 4
      %s30 = sphi 0, %s32
      %s33 = sphi 0, %s30
      %s34 = sphi 0, %s33
      %s50 = sphi 0, %s34
      %s54 = sphi 0, %s54
      %s56 = sphi 0, %s54
      %s57 = sphi 0, %s56
      %s71 = sphi 0, %s57
      %s75 = sphi 0, %s75
      %s77 = sphi 0, %s75
      %s78 = sphi 0, %s77
      %s92 = sphi 0, %s78
      %s96 = sphi 0, %s96
      %s98 = sphi 0, %s96
      %s99 = sphi 0, %s98
      %s113 = sphi 0, %s99
      %s117 = sphi 0, %s117
      %s119 = sphi 0, %s117
      %s120 = sphi 0, %s119
      %s134 = sphi 0, %s120
      %s138 = sphi 0, %s138
      %s140 = sphi 0, %s138
      %s141 = sphi 0, %s140
      %s155 = sphi 0, %s141
      %s159 = sphi 0, %s159
      %s161 = sphi 0, %s159
      %s162 = sphi 0, %s161
      %s176 = sphi 0, %s162
      %s180 = sphi 0, %s180
      %s182 = sphi 0, %s180
      %s183 = sphi 0, %s182
      %s197 = sphi 0, %s183
      %s201 = sphi 0, %s201
      %s203 = sphi 0, %s201
      %s204 = sphi 0, %s203
      %s218 = sphi 0, %s204
      %s224 = sphi 0, %s226
      %s227 = sphi 0, %s224
      %s228 = sphi 0, %s227
      %s244 = sphi 0, %s228
    $region4: #{tpu_custom_call.1} parent=1 // loop_header_branch
      %23 = sbr.rel (%p21) target = $region8
    $region5: #{tpu_custom_call.1} parent=1 // loop_body
      %s25 = ssub.s32 %s20, 1
      %s26 = ssub.s32 %s20, 2
      %s27 = sadd.s32 %s20, 1
      %s28 = ssub.s32 %s20, %s27
      %p29 = scmp.eq.s32.totalorder %s28, 0
      %s31 = sadd.s32 %s30, 1
      %s32 = scalar_select %p29, %s30, %s31
      %p35 = pneg %p29
      %p36 = scmp.eq.s32.totalorder %s20, 1
      %p37 = por %p35, %p36
      %p38 = scmp.ne.s32.totalorder %s30, %s33
      %p39 = scmp.eq.s32.totalorder %s20, 0
      %p40 = por %p38, %p39
      %p41 = scmp.ne.s32.totalorder %s30, %s33
      %p42 = scmp.eq.s32.totalorder %s25, 1
      %p43 = por %p41, %p42
      %p44 = scmp.ne.s32.totalorder %s33, %s34
      %p45 = scmp.eq.s32.totalorder %s25, 0
      %p46 = por %p44, %p45
      %p47 = scmp.ne.s32.totalorder %s33, %s34
      %p48 = scmp.eq.s32.totalorder %s26, 1
      %p49 = por %p47, %p48
      %p51 = scmp.ne.s32.totalorder %s34, %s50
      %p52 = scmp.eq.s32.totalorder %s26, 0
      %p53 = por %p51, %p52
      %s55 = sadd.s32 %s54, 1
      %p58 = scmp.eq.s32.totalorder %s20, 1
      %p59 = scmp.ne.s32.totalorder %s54, %s56
      %p60 = scmp.eq.s32.totalorder %s20, 0
      %p61 = por %p59, %p60
      %p62 = scmp.ne.s32.totalorder %s54, %s56
      %p63 = scmp.eq.s32.totalorder %s25, 1
      %p64 = por %p62, %p63
      %p65 = scmp.ne.s32.totalorder %s56, %s57
      %p66 = scmp.eq.s32.totalorder %s25, 0
      %p67 = por %p65, %p66
      %p68 = scmp.ne.s32.totalorder %s56, %s57
      %p69 = scmp.eq.s32.totalorder %s26, 1
      %p70 = por %p68, %p69
      %p72 = scmp.ne.s32.totalorder %s57, %s71
      %p73 = scmp.eq.s32.totalorder %s26, 0
      %p74 = por %p72, %p73
      %s76 = sadd.s32 %s75, 1
      %p79 = scmp.eq.s32.totalorder %s20, 1
      %p80 = scmp.ne.s32.totalorder %s75, %s77
      %p81 = scmp.eq.s32.totalorder %s20, 0
      %p82 = por %p80, %p81
      %p83 = scmp.ne.s32.totalorder %s75, %s77
      %p84 = scmp.eq.s32.totalorder %s25, 1
      %p85 = por %p83, %p84
      %p86 = scmp.ne.s32.totalorder %s77, %s78
      %p87 = scmp.eq.s32.totalorder %s25, 0
      %p88 = por %p86, %p87
      %p89 = scmp.ne.s32.totalorder %s77, %s78
      %p90 = scmp.eq.s32.totalorder %s26, 1
      %p91 = por %p89, %p90
      %p93 = scmp.ne.s32.totalorder %s78, %s92
      %p94 = scmp.eq.s32.totalorder %s26, 0
      %p95 = por %p93, %p94
      %s97 = sadd.s32 %s96, 1
      %p100 = scmp.eq.s32.totalorder %s20, 1
      %p101 = scmp.ne.s32.totalorder %s96, %s98
      %p102 = scmp.eq.s32.totalorder %s20, 0
      %p103 = por %p101, %p102
      %p104 = scmp.ne.s32.totalorder %s96, %s98
      %p105 = scmp.eq.s32.totalorder %s25, 1
      %p106 = por %p104, %p105
      %p107 = scmp.ne.s32.totalorder %s98, %s99
      %p108 = scmp.eq.s32.totalorder %s25, 0
      %p109 = por %p107, %p108
      %p110 = scmp.ne.s32.totalorder %s98, %s99
      %p111 = scmp.eq.s32.totalorder %s26, 1
      %p112 = por %p110, %p111
      %p114 = scmp.ne.s32.totalorder %s99, %s113
      %p115 = scmp.eq.s32.totalorder %s26, 0
      %p116 = por %p114, %p115
      %s118 = sadd.s32 %s117, 1
      %p121 = scmp.eq.s32.totalorder %s20, 1
      %p122 = scmp.ne.s32.totalorder %s117, %s119
      %p123 = scmp.eq.s32.totalorder %s20, 0
      %p124 = por %p122, %p123
      %p125 = scmp.ne.s32.totalorder %s117, %s119
      %p126 = scmp.eq.s32.totalorder %s25, 1
      %p127 = por %p125, %p126
      %p128 = scmp.ne.s32.totalorder %s119, %s120
      %p129 = scmp.eq.s32.totalorder %s25, 0
      %p130 = por %p128, %p129
      %p131 = scmp.ne.s32.totalorder %s119, %s120
      %p132 = scmp.eq.s32.totalorder %s26, 1
      %p133 = por %p131, %p132
      %p135 = scmp.ne.s32.totalorder %s120, %s134
      %p136 = scmp.eq.s32.totalorder %s26, 0
      %p137 = por %p135, %p136
      %s139 = sadd.s32 %s138, 1
      %p142 = scmp.eq.s32.totalorder %s20, 1
      %p143 = scmp.ne.s32.totalorder %s138, %s140
      %p144 = scmp.eq.s32.totalorder %s20, 0
      %p145 = por %p143, %p144
      %p146 = scmp.ne.s32.totalorder %s138, %s140
      %p147 = scmp.eq.s32.totalorder %s25, 1
      %p148 = por %p146, %p147
      %p149 = scmp.ne.s32.totalorder %s140, %s141
      %p150 = scmp.eq.s32.totalorder %s25, 0
      %p151 = por %p149, %p150
      %p152 = scmp.ne.s32.totalorder %s140, %s141
      %p153 = scmp.eq.s32.totalorder %s26, 1
      %p154 = por %p152, %p153
      %p156 = scmp.ne.s32.totalorder %s141, %s155
      %p157 = scmp.eq.s32.totalorder %s26, 0
      %p158 = por %p156, %p157
      %s160 = sadd.s32 %s159, 1
      %p163 = scmp.eq.s32.totalorder %s20, 1
      %p164 = scmp.ne.s32.totalorder %s159, %s161
      %p165 = scmp.eq.s32.totalorder %s20, 0
      %p166 = por %p164, %p165
      %p167 = scmp.ne.s32.totalorder %s159, %s161
      %p168 = scmp.eq.s32.totalorder %s25, 1
      %p169 = por %p167, %p168
      %p170 = scmp.ne.s32.totalorder %s161, %s162
      %p171 = scmp.eq.s32.totalorder %s25, 0
      %p172 = por %p170, %p171
      %p173 = scmp.ne.s32.totalorder %s161, %s162
      %p174 = scmp.eq.s32.totalorder %s26, 1
      %p175 = por %p173, %p174
      %p177 = scmp.ne.s32.totalorder %s162, %s176
      %p178 = scmp.eq.s32.totalorder %s26, 0
      %p179 = por %p177, %p178
      %s181 = sadd.s32 %s180, 1
      %p184 = scmp.eq.s32.totalorder %s20, 1
      %p185 = scmp.ne.s32.totalorder %s180, %s182
      %p186 = scmp.eq.s32.totalorder %s20, 0
      %p187 = por %p185, %p186
      %p188 = scmp.ne.s32.totalorder %s180, %s182
      %p189 = scmp.eq.s32.totalorder %s25, 1
      %p190 = por %p188, %p189
      %p191 = scmp.ne.s32.totalorder %s182, %s183
      %p192 = scmp.eq.s32.totalorder %s25, 0
      %p193 = por %p191, %p192
      %p194 = scmp.ne.s32.totalorder %s182, %s183
      %p195 = scmp.eq.s32.totalorder %s26, 1
      %p196 = por %p194, %p195
      %p198 = scmp.ne.s32.totalorder %s183, %s197
      %p199 = scmp.eq.s32.totalorder %s26, 0
      %p200 = por %p198, %p199
      %s202 = sadd.s32 %s201, 1
      %p205 = scmp.eq.s32.totalorder %s20, 1
      %p206 = scmp.ne.s32.totalorder %s201, %s203
      %p207 = scmp.eq.s32.totalorder %s20, 0
      %p208 = por %p206, %p207
      %p209 = scmp.ne.s32.totalorder %s201, %s203
      %p210 = scmp.eq.s32.totalorder %s25, 1
      %p211 = por %p209, %p210
      %p212 = scmp.ne.s32.totalorder %s203, %s204
      %p213 = scmp.eq.s32.totalorder %s25, 0
      %p214 = por %p212, %p213
      %p215 = scmp.ne.s32.totalorder %s203, %s204
      %p216 = scmp.eq.s32.totalorder %s26, 1
      %p217 = por %p215, %p216
      %p219 = scmp.ne.s32.totalorder %s204, %s218
      %p220 = scmp.eq.s32.totalorder %s26, 0
      %p221 = por %p219, %p220
      %s222 = ssub.s32 %s20, %s27
      %p223 = scmp.eq.s32.totalorder %s222, 0
      %s225 = sadd.s32 %s224, 1
      %s226 = scalar_select %p223, %s224, %s225
      %p229 = pneg %p223
      %p230 = scmp.eq.s32.totalorder %s20, 1
      %p231 = por %p229, %p230
      %p232 = scmp.ne.s32.totalorder %s224, %s227
      %p233 = scmp.eq.s32.totalorder %s20, 0
      %p234 = por %p232, %p233
      %p235 = scmp.ne.s32.totalorder %s224, %s227
      %p236 = scmp.eq.s32.totalorder %s25, 1
      %p237 = por %p235, %p236
      %p238 = scmp.ne.s32.totalorder %s227, %s228
      %p239 = scmp.eq.s32.totalorder %s25, 0
      %p240 = por %p238, %p239
      %p241 = scmp.ne.s32.totalorder %s227, %s228
      %p242 = scmp.eq.s32.totalorder %s26, 1
      %p243 = por %p241, %p242
      %p245 = scmp.ne.s32.totalorder %s228, %s244
      %p246 = scmp.eq.s32.totalorder %s26, 0
      %p247 = por %p245, %p246
      %p248 = scmp.le.s32.totalorder 1, %s20
      %p249 = scmp.lt.s32.totalorder %s20, 3
      %p250 = pnand %p248, %p249
      %p251 = pneg %p250
      // Predicated region
      $region9: #{tpu_custom_call.1} parent=5 // pred_check
        _
      $region10: #{tpu_custom_call.1} parent=5 // pred_check_branch
        %253 = sbr.rel (%p250) target = $region12
      $region11: #{tpu_custom_call.1} parent=5 // pred_region
        %s254 = ssub.s32 %s20, 1
        // Predicated region
        $region13: #{tpu_custom_call.1} parent=11 // pred_check
          %p255 = pneg %p67
        $region14: #{tpu_custom_call.1} parent=11 // pred_check_branch
          %257 = sbr.rel (%p255) target = $region16
        $region15: #{tpu_custom_call.1} parent=11 // pred_region
          _
        $region16: #{tpu_custom_call.1} parent=11 // pred_fallthru
          _
        // Predicated region
        $region17: #{tpu_custom_call.1} parent=11 // pred_check
          %p258 = pneg %p88
        $region18: #{tpu_custom_call.1} parent=11 // pred_check_branch
          %260 = sbr.rel (%p258) target = $region20
        $region19: #{tpu_custom_call.1} parent=11 // pred_region
          %s262 = ssub.s32 4608, 4608
          %263 = vsyncadd [#allocation3], %s262
          %s264 = sshll.u32 [#allocation2], 4
          %s265 = int_to_ptr.vmem [resolvable:$true] %s264
          %270 = dma.hbm_to_vmem [thread:$0]  %s2, 4608, %s265, [#allocation3], 256, 256, 16
        $region20: #{tpu_custom_call.1} parent=11 // pred_fallthru
          _
        // Predicated region
        $region21: #{tpu_custom_call.1} parent=11 // pred_check
          %p271 = pneg %p109
        $region22: #{tpu_custom_call.1} parent=11 // pred_check_branch
          %273 = sbr.rel (%p271) target = $region24
        $region23: #{tpu_custom_call.1} parent=11 // pred_region
          _
        $region24: #{tpu_custom_call.1} parent=11 // pred_fallthru
          _
        // Predicated region
        $region25: #{tpu_custom_call.1} parent=11 // pred_check
          %p274 = pneg %p130
        $region26: #{tpu_custom_call.1} parent=11 // pred_check_branch
          %276 = sbr.rel (%p274) target = $region28
        $region27: #{tpu_custom_call.1} parent=11 // pred_region
          _
        $region28: #{tpu_custom_call.1} parent=11 // pred_fallthru
          _
        // Predicated region
        $region29: #{tpu_custom_call.1} parent=11 // pred_check
          %p277 = pneg %p151
        $region30: #{tpu_custom_call.1} parent=11 // pred_check_branch
          %279 = sbr.rel (%p277) target = $region32
        $region31: #{tpu_custom_call.1} parent=11 // pred_region
          %s281 = ssub.s32 3584, 3584
          %282 = vsyncadd [#allocation6], %s281
          %s283 = sshll.u32 [#allocation5], 4
          %s284 = int_to_ptr.vmem [resolvable:$true] %s283
          %289 = dma.hbm_to_vmem [thread:$0]  %s5, 3584, %s284, [#allocation6], 128, 128, 8
        $region32: #{tpu_custom_call.1} parent=11 // pred_fallthru
          _
        // Predicated region
        $region33: #{tpu_custom_call.1} parent=11 // pred_check
          %p290 = pneg %p172
        $region34: #{tpu_custom_call.1} parent=11 // pred_check_branch
          %292 = sbr.rel (%p290) target = $region36
        $region35: #{tpu_custom_call.1} parent=11 // pred_region
          %s294 = ssub.s32 448, 448
          %295 = vsyncadd [#allocation6], %s294
          %s296 = sshll.u32 [#allocation7], 4
          %s297 = int_to_ptr.vmem [resolvable:$true] %s296
          %302 = dma.hbm_to_vmem [thread:$0]  %s6, 448, %s297, [#allocation6], 32, 32, 2
        $region36: #{tpu_custom_call.1} parent=11 // pred_fallthru
          _
        // Predicated region
        $region37: #{tpu_custom_call.1} parent=11 // pred_check
          %p303 = pneg %p193
        $region38: #{tpu_custom_call.1} parent=11 // pred_check_branch
          %305 = sbr.rel (%p303) target = $region40
        $region39: #{tpu_custom_call.1} parent=11 // pred_region
          _
        $region40: #{tpu_custom_call.1} parent=11 // pred_fallthru
          _
        // Predicated region
        $region41: #{tpu_custom_call.1} parent=11 // pred_check
          %p306 = pneg %p214
        $region42: #{tpu_custom_call.1} parent=11 // pred_check_branch
          %308 = sbr.rel (%p306) target = $region44
        $region43: #{tpu_custom_call.1} parent=11 // pred_region
          _
        $region44: #{tpu_custom_call.1} parent=11 // pred_fallthru
          _
      $region12: #{tpu_custom_call.1} parent=5 // pred_fallthru
        _
      %p309 = scmp.lt.s32.totalorder %s20, 2
      // Predicated region
      $region45: #{tpu_custom_call.1} parent=5 // pred_check
        %p310 = pneg %p309
      $region46: #{tpu_custom_call.1} parent=5 // pred_check_branch
        %312 = sbr.rel (%p310) target = $region48
      $region47: #{tpu_custom_call.1} parent=5 // pred_region
        // Predicated region
        $region49: #{tpu_custom_call.1} parent=47 // pred_check
          %p313 = pneg %p40
        $region50: #{tpu_custom_call.1} parent=47 // pred_check_branch
          %315 = sbr.rel (%p313) target = $region52
        $region51: #{tpu_custom_call.1} parent=47 // pred_region
          %s316 = smul.u32 18, %s20
          %p317 = scmp.lt.s32.totalorder %s316, 35
          %s318 = scalar_select %p317, %s316, 35
          %s319 = smul.addr %s318, 4
          %s320 = scalar_lea.vmem %s0, %s319
          %s321 = smul.u32 18, %s20
        $region52: #{tpu_custom_call.1} parent=47 // pred_fallthru
          _
      $region48: #{tpu_custom_call.1} parent=5 // pred_fallthru
        _
      %p322 = scmp.le.s32.totalorder 1, %s20
      %p323 = scmp.lt.s32.totalorder %s20, 3
      %p324 = pnand %p322, %p323
      %p325 = pneg %p324
      // Predicated region
      $region53: #{tpu_custom_call.1} parent=5 // pred_check
        _
      $region54: #{tpu_custom_call.1} parent=5 // pred_check_branch
        %327 = sbr.rel (%p324) target = $region56
      $region55: #{tpu_custom_call.1} parent=5 // pred_region
        %s328 = ssub.s32 %s20, 1
        // Predicated region
        $region57: #{tpu_custom_call.1} parent=55 // pred_check
          %p329 = pneg %p88
        $region58: #{tpu_custom_call.1} parent=55 // pred_check_branch
          %331 = sbr.rel (%p329) target = $region60
        $region59: #{tpu_custom_call.1} parent=55 // pred_region
          %332 = dma.done [#allocation3], 4608
        $region60: #{tpu_custom_call.1} parent=55 // pred_fallthru
          _
        // Predicated region
        $region61: #{tpu_custom_call.1} parent=55 // pred_check
          %p333 = pneg %p151
        $region62: #{tpu_custom_call.1} parent=55 // pred_check_branch
          %335 = sbr.rel (%p333) target = $region64
        $region63: #{tpu_custom_call.1} parent=55 // pred_region
          %336 = dma.done [#allocation6], 3584
        $region64: #{tpu_custom_call.1} parent=55 // pred_fallthru
          _
        // Predicated region
        $region65: #{tpu_custom_call.1} parent=55 // pred_check
          %p337 = pneg %p172
        $region66: #{tpu_custom_call.1} parent=55 // pred_check_branch
          %339 = sbr.rel (%p337) target = $region68
        $region67: #{tpu_custom_call.1} parent=55 // pred_region
          %340 = dma.done [#allocation6], 448
        $region68: #{tpu_custom_call.1} parent=55 // pred_fallthru
          _
        %s341 = smul.u32 18, %s25
        %p342 = scmp.lt.s32.totalorder %s341, 35
        %s343 = scalar_select %p342, %s341, 35
        %s344 = smul.addr %s343, 4
        %s345 = scalar_lea.vmem %s0, %s344
        %p346 = pneg %p46
        %p347 = pneg %p43
        %p348 = pneg %p67
        %p349 = pneg %p64
        %p350 = pneg %p88
        %p351 = pneg %p85
        %p352 = pneg %p109
        %p353 = pneg %p106
        %p354 = pneg %p130
        %p355 = pneg %p127
        %p356 = pneg %p151
        %p357 = pneg %p148
        %p358 = pneg %p172
        %p359 = pneg %p169
        %p360 = pneg %p193
        %p361 = pneg %p190
        %p362 = pneg %p214
        %p363 = pneg %p211
        %p364 = pneg %p240
        %p365 = pneg %p237
        %s366 = sand.u32 %s227, 1
        %s367 = scalar_lea.sflag [#allocation4], %s366
        %s368 = sand.u32 %s227, 1
        %s369 = smul.addr %s368, 8
        %s370 = scalar_lea.vmem [#allocation8], %s369
        %s371 = smul.u32 18, %s25
        %p372 = scmp.lt.s32.totalorder %s371, 35
        %s373 = scalar_select %p372, %s371, 35
        %s374 = smul.addr %s373, 4
        %s375 = scalar_lea.vmem %s0, %s374
        %s376 = smul.u32 18, %s25
        %v378 = vld [vmem:[%s375] sm:$0xf]
        %v379 = vld [vmem:[%s375 + $0x4] sm:$0xf]
        %v380 = vld [vmem:[%s375 + $0x8] sm:$0xf]
        %v381 = vld [vmem:[%s375 + $0xc] sm:$0xf]
        %v382 = vld [vmem:[%s375 + $0x10] sm:$0xf]
        %v383 = vld [vmem:[%s375 + $0x14] sm:$0xf]
        %v384 = vld [vmem:[%s375 + $0x18] sm:$0xf]
        %v385 = vld [vmem:[%s375 + $0x1c] sm:$0xf]
        %v386 = vld [vmem:[%s375 + $0x20] sm:$0xf]
        %v387 = vld [vmem:[%s375 + $0x24] sm:$0xf]
        %v388 = vld [vmem:[%s375 + $0x28] sm:$0xf]
        %v389 = vld [vmem:[%s375 + $0x2c] sm:$0xf]
        %v390 = vld [vmem:[%s375 + $0x30] sm:$0xf]
        %v391 = vld [vmem:[%s375 + $0x34] sm:$0xf]
        %v392 = vld [vmem:[%s375 + $0x38] sm:$0xf]
        %v393 = vld [vmem:[%s375 + $0x3c] sm:$0xf]
        %v394 = vld [vmem:[%s375 + $0x40] sm:$0xf]
        %v395 = vld [vmem:[%s375 + $0x44] sm:$0xf]
        %v396 = vld [vmem:[%s1] sm:$0xff]
        %v397 = vld [vmem:[%s1 + $0x8] sm:$0xff]
        %v398 = vld [vmem:[%s1 + $0x10] sm:$0xff]
        %v399 = vld [vmem:[%s1 + $0x18] sm:$0xff]
        %v400 = vld [vmem:[%s1 + $0x20] sm:$0xff]
        %v401 = vld [vmem:[%s1 + $0x28] sm:$0xff]
        %v402 = vld [vmem:[%s1 + $0x30] sm:$0xff]
        %v403 = vld [vmem:[%s1 + $0x38] sm:$0xff]
        %v404 = vld [vmem:[%s1 + $0x40] sm:$0xff]
        %v405 = vld [vmem:[%s1 + $0x48] sm:$0xff]
        %v406 = vld [vmem:[%s1 + $0x50] sm:$0x33]
        %v407 = vld [vmem:[#allocation2] sm:$0xff]
        %v408 = vld [vmem:[#allocation2 + $0x8] sm:$0xff]
        %v409 = vld [vmem:[#allocation2 + $0x10] sm:$0xff]
        %v410 = vld [vmem:[#allocation2 + $0x18] sm:$0xff]
        %v411 = vld [vmem:[#allocation2 + $0x20] sm:$0xff]
        %v412 = vld [vmem:[#allocation2 + $0x28] sm:$0xff]
        %v413 = vld [vmem:[#allocation2 + $0x30] sm:$0xff]
        %v414 = vld [vmem:[#allocation2 + $0x38] sm:$0xff]
        %v415 = vld [vmem:[#allocation2 + $0x40] sm:$0xff]
        %v416 = vld [vmem:[#allocation2 + $0x48] sm:$0xff]
        %v417 = vld [vmem:[#allocation2 + $0x50] sm:$0xff]
        %v418 = vld [vmem:[#allocation2 + $0x58] sm:$0xff]
        %v419 = vld [vmem:[#allocation2 + $0x60] sm:$0xff]
        %v420 = vld [vmem:[#allocation2 + $0x68] sm:$0xff]
        %v421 = vld [vmem:[#allocation2 + $0x70] sm:$0xff]
        %v422 = vld [vmem:[#allocation2 + $0x78] sm:$0xff]
        %v423 = vld [vmem:[#allocation2 + $0x80] sm:$0xff]
        %v424 = vld [vmem:[#allocation2 + $0x88] sm:$0xff]
        %v425 = vld [vmem:[#allocation2 + $0x90] sm:$0xff]
        %v426 = vld [vmem:[#allocation2 + $0x98] sm:$0xff]
        %v427 = vld [vmem:[#allocation2 + $0xa0] sm:$0xff]
        %v428 = vld [vmem:[#allocation2 + $0xa8] sm:$0xff]
        %v429 = vld [vmem:[#allocation2 + $0xb0] sm:$0xff]
        %v430 = vld [vmem:[#allocation2 + $0xb8] sm:$0xff]
        %v431 = vld [vmem:[#allocation2 + $0xc0] sm:$0xff]
        %v432 = vld [vmem:[#allocation2 + $0xc8] sm:$0xff]
        %v433 = vld [vmem:[#allocation2 + $0xd0] sm:$0xff]
        %v434 = vld [vmem:[#allocation2 + $0xd8] sm:$0xff]
        %v435 = vld [vmem:[#allocation2 + $0xe0] sm:$0xff]
        %v436 = vld [vmem:[#allocation2 + $0xe8] sm:$0xff]
        %v437 = vld [vmem:[#allocation2 + $0xf0] sm:$0xff]
        %v438 = vld [vmem:[#allocation2 + $0xf8] sm:$0xff]
        %v439 = vld [vmem:[#allocation2 + $0x100] sm:$0xff]
        %v440 = vld [vmem:[#allocation2 + $0x108] sm:$0xff]
        %v441 = vld [vmem:[#allocation2 + $0x110] sm:$0xff]
        %v442 = vld [vmem:[#allocation2 + $0x118] sm:$0xff]
        %v461 = vunpack.c.l.b16 %v378
        %v462 = vunpack.c.l.b16 %v379
        %v463 = vunpack.c.l.b16 %v380
        %v464 = vunpack.c.l.b16 %v381
        %v465 = vunpack.c.l.b16 %v382
        %v466 = vunpack.c.l.b16 %v383
        %v467 = vunpack.c.l.b16 %v384
        %v468 = vunpack.c.l.b16 %v385
        %v469 = vunpack.c.l.b16 %v386
        %v470 = vunpack.c.l.b16 %v387
        %v471 = vunpack.c.l.b16 %v388
        %v472 = vunpack.c.l.b16 %v389
        %v473 = vunpack.c.l.b16 %v390
        %v474 = vunpack.c.l.b16 %v391
        %v475 = vunpack.c.l.b16 %v392
        %v476 = vunpack.c.l.b16 %v393
        %v477 = vunpack.c.l.b16 %v394
        %v478 = vunpack.c.l.b16 %v395
        %v479 = vpack.c.b16 %v462, %v461
        %v480 = vpack.c.b16 %v464, %v463
        %v481 = vpack.c.b16 %v466, %v465
        %v482 = vpack.c.b16 %v468, %v467
        %v483 = vpack.c.b16 %v470, %v469
        %v484 = vpack.c.b16 %v472, %v471
        %v485 = vpack.c.b16 %v474, %v473
        %v486 = vpack.c.b16 %v476, %v475
        %v487 = vpack.c.b16 %v478, %v477
        %v499 = vunpack.c.l.b16 %v396
        %v500 = vunpack.c.h.b16 %v396
        %v501 = vunpack.c.l.b16 %v397
        %v502 = vunpack.c.h.b16 %v397
        %v503 = vunpack.c.l.b16 %v398
        %v504 = vunpack.c.h.b16 %v398
        %v505 = vunpack.c.l.b16 %v399
        %v506 = vunpack.c.h.b16 %v399
        %v507 = vunpack.c.l.b16 %v400
        %v508 = vunpack.c.h.b16 %v400
        %v509 = vunpack.c.l.b16 %v401
        %v510 = vunpack.c.h.b16 %v401
        %v511 = vunpack.c.l.b16 %v402
        %v512 = vunpack.c.h.b16 %v402
        %v513 = vunpack.c.l.b16 %v403
        %v514 = vunpack.c.h.b16 %v403
        %v515 = vunpack.c.l.b16 %v404
        %v516 = vunpack.c.h.b16 %v404
        %v517 = vunpack.c.l.b16 %v405
        %v518 = vunpack.c.h.b16 %v405
        %v519 = vunpack.c.l.b16 %v406
        %v520 = vunpack.c.h.b16 %v406
        %v521 = vpack.c.b16 %v501, %v499
        %v522 = vpack.c.b16 %v502, %v500
        %v523 = vpack.c.b16 %v505, %v503
        %v524 = vpack.c.b16 %v506, %v504
        %v525 = vpack.c.b16 %v509, %v507
        %v526 = vpack.c.b16 %v510, %v508
        %v527 = vpack.c.b16 %v513, %v511
        %v528 = vpack.c.b16 %v514, %v512
        %v529 = vpack.c.b16 %v517, %v515
        %v530 = vpack.c.b16 %v518, %v516
        %v531 = vpack.c.b16 %v519, %v519
        %v532 = vpack.c.b16 %v520, %v520
        %vm543 = vcmask 687104
        %v545 = vsel %vm543, %v479, 0
        %v548 = vsel %vm543, %v480, 0
        %v551 = vsel %vm543, %v481, 0
        %v554 = vsel %vm543, %v482, 0
        %v557 = vsel %vm543, %v483, 0
        %v560 = vsel %vm543, %v484, 0
        %v563 = vsel %vm543, %v485, 0
        %v566 = vsel %vm543, %v486, 0
        %v569 = vsel %vm543, %v487, 0
        %vm571 = vcmask 1041408
        %v573 = vsel %vm571, %v531, 0
        %v576 = vsel %vm571, %v532, 0
        %578 = vmatprep.subr.bf16.mxu0 %v522
        %579 = vmatpush1.bf16.msra.mxu0 %v521
        %580 = vmatprep.subr.bf16.mxu0 %v524
        %581 = vmatpush1.bf16.msra.mxu0 %v523
        %582 = vmatprep.subr.bf16.mxu0 %v526
        %583 = vmatpush1.bf16.msra.mxu0 %v525
        %584 = vmatprep.subr.bf16.mxu0 %v528
        %585 = vmatpush1.bf16.msra.mxu0 %v527
        %586 = vmatprep.subr.bf16.mxu0 %v530
        %587 = vmatpush1.bf16.msra.mxu0 %v529
        %588 = vmatprep.subr.bf16.mxu0 %v576
        %589 = vmatpush1.bf16.msra.mxu0 %v573
        %590 = vmatprep.subr.bf16.mxu0 0
        %591 = vmatpush1.bf16.msra.mxu0 0
        %592 = vmatprep.subr.bf16.mxu0 0
        %593 = vmatpush1.bf16.msra.mxu0 0
        %594 = vmatprep.subr.bf16.mxu0 0
        %595 = vmatpush1.bf16.msra.mxu0 0
        %596 = vmatprep.subr.bf16.mxu0 0
        %597 = vmatpush1.bf16.msra.mxu0 0
        %598 = vmatprep.subr.bf16.mxu0 0
        %599 = vmatpush1.bf16.msra.mxu0 0
        %600 = vmatprep.subr.bf16.mxu0 0
        %601 = vmatpush1.bf16.msra.mxu0 0
        %602 = vmatprep.subr.bf16.mxu0 0
        %603 = vmatpush1.bf16.msra.mxu0 0
        %604 = vmatprep.subr.bf16.mxu0 0
        %605 = vmatpush1.bf16.msra.mxu0 0
        %606 = vmatprep.subr.bf16.mxu0 0
        %607 = vmatpush1.bf16.msra.mxu0 0
        %608 = vmatprep.subr.bf16.mxu0 0
        %609 = vmatpush1.bf16.msra.mxu0 0
        %610 = vmatprep.mubr.bf16.mxu0 0
        %611 = vmatmul.mubr.bf16.gmra.mrb[0].mxu0 %v545
        %v612 = vpop.f32.mrb[0].mxu0
        %v613 = vadd.f32 %v407, %v612
        %v614 = vpop.f32.mrb[0].mxu0
        %v615 = vadd.f32 %v408, %v614
        %v616 = vpop.f32.mrb[0].mxu0
        %v617 = vadd.f32 %v409, %v616
        %v618 = vpop.f32.mrb[0].mxu0
        %v619 = vadd.f32 %v410, %v618
        %620 = vmatprep.mubr.bf16.mxu0 0
        %621 = vmatmul.mubr.bf16.gmra.mrb[0].mxu0 %v548
        %v622 = vpop.f32.mrb[0].mxu0
        %v623 = vadd.f32 %v411, %v622
        %v624 = vpop.f32.mrb[0].mxu0
        %v625 = vadd.f32 %v412, %v624
        %v626 = vpop.f32.mrb[0].mxu0
        %v627 = vadd.f32 %v413, %v626
        %v628 = vpop.f32.mrb[0].mxu0
        %v629 = vadd.f32 %v414, %v628
        %630 = vmatprep.mubr.bf16.mxu0 0
        %631 = vmatmul.mubr.bf16.gmra.mrb[0].mxu0 %v551
        %v632 = vpop.f32.mrb[0].mxu0
        %v633 = vadd.f32 %v415, %v632
        %v634 = vpop.f32.mrb[0].mxu0
        %v635 = vadd.f32 %v416, %v634
        %v636 = vpop.f32.mrb[0].mxu0
        %v637 = vadd.f32 %v417, %v636
        %v638 = vpop.f32.mrb[0].mxu0
        %v639 = vadd.f32 %v418, %v638
        %640 = vmatprep.mubr.bf16.mxu0 0
        %641 = vmatmul.mubr.bf16.gmra.mrb[0].mxu0 %v554
        %v642 = vpop.f32.mrb[0].mxu0
        %v643 = vadd.f32 %v419, %v642
        %v644 = vpop.f32.mrb[0].mxu0
        %v645 = vadd.f32 %v420, %v644
        %v646 = vpop.f32.mrb[0].mxu0
        %v647 = vadd.f32 %v421, %v646
        %v648 = vpop.f32.mrb[0].mxu0
        %v649 = vadd.f32 %v422, %v648
        %650 = vmatprep.mubr.bf16.mxu0 0
        %651 = vmatmul.mubr.bf16.gmra.mrb[0].mxu0 %v557
        %v652 = vpop.f32.mrb[0].mxu0
        %v653 = vadd.f32 %v423, %v652
        %v654 = vpop.f32.mrb[0].mxu0
        %v655 = vadd.f32 %v424, %v654
        %v656 = vpop.f32.mrb[0].mxu0
        %v657 = vadd.f32 %v425, %v656
        %v658 = vpop.f32.mrb[0].mxu0
        %v659 = vadd.f32 %v426, %v658
        %660 = vmatprep.mubr.bf16.mxu0 0
        %661 = vmatmul.mubr.bf16.gmra.mrb[0].mxu0 %v560
        %v662 = vpop.f32.mrb[0].mxu0
        %v663 = vadd.f32 %v427, %v662
        %v664 = vpop.f32.mrb[0].mxu0
        %v665 = vadd.f32 %v428, %v664
        %v666 = vpop.f32.mrb[0].mxu0
        %v667 = vadd.f32 %v429, %v666
        %v668 = vpop.f32.mrb[0].mxu0
        %v669 = vadd.f32 %v430, %v668
        %670 = vmatprep.mubr.bf16.mxu0 0
        %671 = vmatmul.mubr.bf16.gmra.mrb[0].mxu0 %v563
        %v672 = vpop.f32.mrb[0].mxu0
        %v673 = vadd.f32 %v431, %v672
        %v674 = vpop.f32.mrb[0].mxu0
        %v675 = vadd.f32 %v432, %v674
        %v676 = vpop.f32.mrb[0].mxu0
        %v677 = vadd.f32 %v433, %v676
        %v678 = vpop.f32.mrb[0].mxu0
        %v679 = vadd.f32 %v434, %v678
        %680 = vmatprep.mubr.bf16.mxu0 0
        %681 = vmatmul.mubr.bf16.gmra.mrb[0].mxu0 %v566
        %v682 = vpop.f32.mrb[0].mxu0
        %v683 = vadd.f32 %v435, %v682
        %v684 = vpop.f32.mrb[0].mxu0
        %v685 = vadd.f32 %v436, %v684
        %v686 = vpop.f32.mrb[0].mxu0
        %v687 = vadd.f32 %v437, %v686
        %v688 = vpop.f32.mrb[0].mxu0
        %v689 = vadd.f32 %v438, %v688
        %690 = vmatprep.mubr.bf16.mxu0 0
        %691 = vmatmul.mubr.bf16.gmra.mrb[0].mxu0 %v569
        %v692 = vpop.f32.mrb[0].mxu0
        %v693 = vadd.f32 %v439, %v692
        %v694 = vpop.f32.mrb[0].mxu0
        %v695 = vadd.f32 %v440, %v694
        %v696 = vpop.f32.mrb[0].mxu0
        %v697 = vadd.f32 %v441, %v696
        %v698 = vpop.f32.mrb[0].mxu0
        %v699 = vadd.f32 %v442, %v698
        %700 = vdwg.mxu0
        %vm701 = vcmp.ge.f32.partialorder %v613, 0.0
        %vm702 = vcmp.ge.f32.partialorder %v615, 0.0
        %vm703 = vcmp.ge.f32.partialorder %v617, 0.0
        %vm704 = vcmp.ge.f32.partialorder %v619, 0.0
        %vm705 = vcmp.ge.f32.partialorder %v623, 0.0
        %vm706 = vcmp.ge.f32.partialorder %v625, 0.0
        %vm707 = vcmp.ge.f32.partialorder %v627, 0.0
        %vm708 = vcmp.ge.f32.partialorder %v629, 0.0
        %vm709 = vcmp.ge.f32.partialorder %v633, 0.0
        %vm710 = vcmp.ge.f32.partialorder %v635, 0.0
        %vm711 = vcmp.ge.f32.partialorder %v637, 0.0
        %vm712 = vcmp.ge.f32.partialorder %v639, 0.0
        %vm713 = vcmp.ge.f32.partialorder %v643, 0.0
        %vm714 = vcmp.ge.f32.partialorder %v645, 0.0
        %vm715 = vcmp.ge.f32.partialorder %v647, 0.0
        %vm716 = vcmp.ge.f32.partialorder %v649, 0.0
        %vm717 = vcmp.ge.f32.partialorder %v653, 0.0
        %vm718 = vcmp.ge.f32.partialorder %v655, 0.0
        %vm719 = vcmp.ge.f32.partialorder %v657, 0.0
        %vm720 = vcmp.ge.f32.partialorder %v659, 0.0
        %vm721 = vcmp.ge.f32.partialorder %v663, 0.0
        %vm722 = vcmp.ge.f32.partialorder %v665, 0.0
        %vm723 = vcmp.ge.f32.partialorder %v667, 0.0
        %vm724 = vcmp.ge.f32.partialorder %v669, 0.0
        %vm725 = vcmp.ge.f32.partialorder %v673, 0.0
        %vm726 = vcmp.ge.f32.partialorder %v675, 0.0
        %vm727 = vcmp.ge.f32.partialorder %v677, 0.0
        %vm728 = vcmp.ge.f32.partialorder %v679, 0.0
        %vm729 = vcmp.ge.f32.partialorder %v683, 0.0
        %vm730 = vcmp.ge.f32.partialorder %v685, 0.0
        %vm731 = vcmp.ge.f32.partialorder %v687, 0.0
        %vm732 = vcmp.ge.f32.partialorder %v689, 0.0
        %vm733 = vcmp.ge.f32.partialorder %v693, 0.0
        %vm734 = vcmp.ge.f32.partialorder %v695, 0.0
        %vm735 = vcmp.ge.f32.partialorder %v697, 0.0
        %vm736 = vcmp.ge.f32.partialorder %v699, 0.0
        %v737 = vmul.f32 %v613, 0.01
        %v738 = vmul.f32 %v615, 0.01
        %v739 = vmul.f32 %v617, 0.01
        %v740 = vmul.f32 %v619, 0.01
        %v741 = vmul.f32 %v623, 0.01
        %v742 = vmul.f32 %v625, 0.01
        %v743 = vmul.f32 %v627, 0.01
        %v744 = vmul.f32 %v629, 0.01
        %v745 = vmul.f32 %v633, 0.01
        %v746 = vmul.f32 %v635, 0.01
        %v747 = vmul.f32 %v637, 0.01
        %v748 = vmul.f32 %v639, 0.01
        %v749 = vmul.f32 %v643, 0.01
        %v750 = vmul.f32 %v645, 0.01
        %v751 = vmul.f32 %v647, 0.01
        %v752 = vmul.f32 %v649, 0.01
        %v753 = vmul.f32 %v653, 0.01
        %v754 = vmul.f32 %v655, 0.01
        %v755 = vmul.f32 %v657, 0.01
        %v756 = vmul.f32 %v659, 0.01
        %v757 = vmul.f32 %v663, 0.01
        %v758 = vmul.f32 %v665, 0.01
        %v759 = vmul.f32 %v667, 0.01
        %v760 = vmul.f32 %v669, 0.01
        %v761 = vmul.f32 %v673, 0.01
        %v762 = vmul.f32 %v675, 0.01
        %v763 = vmul.f32 %v677, 0.01
        %v764 = vmul.f32 %v679, 0.01
        %v765 = vmul.f32 %v683, 0.01
        %v766 = vmul.f32 %v685, 0.01
        %v767 = vmul.f32 %v687, 0.01
        %v768 = vmul.f32 %v689, 0.01
        %v769 = vmul.f32 %v693, 0.01
        %v770 = vmul.f32 %v695, 0.01
        %v771 = vmul.f32 %v697, 0.01
        %v772 = vmul.f32 %v699, 0.01
        %v773 = vsel %vm701, %v613, %v737
        %v774 = vsel %vm702, %v615, %v738
        %v775 = vsel %vm703, %v617, %v739
        %v776 = vsel %vm704, %v619, %v740
        %v777 = vsel %vm705, %v623, %v741
        %v778 = vsel %vm706, %v625, %v742
        %v779 = vsel %vm707, %v627, %v743
        %v780 = vsel %vm708, %v629, %v744
        %v781 = vsel %vm709, %v633, %v745
        %v782 = vsel %vm710, %v635, %v746
        %v783 = vsel %vm711, %v637, %v747
        %v784 = vsel %vm712, %v639, %v748
        %v785 = vsel %vm713, %v643, %v749
        %v786 = vsel %vm714, %v645, %v750
        %v787 = vsel %vm715, %v647, %v751
        %v788 = vsel %vm716, %v649, %v752
        %v789 = vsel %vm717, %v653, %v753
        %v790 = vsel %vm718, %v655, %v754
        %v791 = vsel %vm719, %v657, %v755
        %v792 = vsel %vm720, %v659, %v756
        %v793 = vsel %vm721, %v663, %v757
        %v794 = vsel %vm722, %v665, %v758
        %v795 = vsel %vm723, %v667, %v759
        %v796 = vsel %vm724, %v669, %v760
        %v797 = vsel %vm725, %v673, %v761
        %v798 = vsel %vm726, %v675, %v762
        %v799 = vsel %vm727, %v677, %v763
        %v800 = vsel %vm728, %v679, %v764
        %v801 = vsel %vm729, %v683, %v765
        %v802 = vsel %vm730, %v685, %v766
        %v803 = vsel %vm731, %v687, %v767
        %v804 = vsel %vm732, %v689, %v768
        %v805 = vsel %vm733, %v693, %v769
        %v806 = vsel %vm734, %v695, %v770
        %v807 = vsel %vm735, %v697, %v771
        %v808 = vsel %vm736, %v699, %v772
        %v809 = vpack.c.bf16 %v775, %v773
        %v810 = vpack.c.bf16 %v776, %v774
        %v811 = vpack.c.bf16 %v779, %v777
        %v812 = vpack.c.bf16 %v780, %v778
        %v813 = vpack.c.bf16 %v783, %v781
        %v814 = vpack.c.bf16 %v784, %v782
        %v815 = vpack.c.bf16 %v787, %v785
        %v816 = vpack.c.bf16 %v788, %v786
        %v817 = vpack.c.bf16 %v791, %v789
        %v818 = vpack.c.bf16 %v792, %v790
        %v819 = vpack.c.bf16 %v795, %v793
        %v820 = vpack.c.bf16 %v796, %v794
        %v821 = vpack.c.bf16 %v799, %v797
        %v822 = vpack.c.bf16 %v800, %v798
        %v823 = vpack.c.bf16 %v803, %v801
        %v824 = vpack.c.bf16 %v804, %v802
        %v825 = vpack.c.bf16 %v807, %v805
        %v826 = vpack.c.bf16 %v808, %v806
        %v827 = vld [vmem:[%s3] sm:$0xff]
        %v828 = vld [vmem:[%s3 + $0x8] sm:$0xff]
        %v829 = vld [vmem:[%s3 + $0x10] sm:$0xff]
        %v830 = vld [vmem:[%s3 + $0x18] sm:$0xff]
        %v831 = vld [vmem:[%s3 + $0x20] sm:$0xff]
        %v832 = vld [vmem:[%s3 + $0x28] sm:$0xff]
        %v833 = vld [vmem:[%s3 + $0x30] sm:$0xff]
        %v834 = vld [vmem:[%s3 + $0x38] sm:$0xff]
        %v835 = vld [vmem:[%s3 + $0x40] sm:$0xff]
        %v836 = vld [vmem:[%s3 + $0x48] sm:$0xff]
        %v837 = vld [vmem:[%s3 + $0x50] sm:$0xff]
        %v838 = vld [vmem:[%s3 + $0x58] sm:$0xff]
        %v839 = vld [vmem:[%s3 + $0x60] sm:$0xff]
        %v840 = vld [vmem:[%s3 + $0x68] sm:$0xff]
        %v841 = vld [vmem:[%s3 + $0x70] sm:$0xff]
        %v842 = vld [vmem:[%s3 + $0x78] sm:$0xff]
        %v843 = vld [vmem:[%s3 + $0x80] sm:$0xff]
        %v844 = vld [vmem:[%s3 + $0x88] sm:$0xff]
        %v845 = vld [vmem:[%s3 + $0x90] sm:$0xff]
        %v846 = vld [vmem:[%s3 + $0x98] sm:$0xff]
        %v847 = vld [vmem:[%s3 + $0xa0] sm:$0xff]
        %v848 = vld [vmem:[%s3 + $0xa8] sm:$0xff]
        %v849 = vld [vmem:[%s3 + $0xb0] sm:$0xff]
        %v850 = vld [vmem:[%s3 + $0xb8] sm:$0xff]
        %v851 = vld [vmem:[%s3 + $0xc0] sm:$0xff]
        %v852 = vld [vmem:[%s3 + $0xc8] sm:$0xff]
        %v853 = vld [vmem:[%s3 + $0xd0] sm:$0xff]
        %v854 = vld [vmem:[%s3 + $0xd8] sm:$0xff]
        %v855 = vld [vmem:[%s3 + $0xe0] sm:$0xff]
        %v856 = vld [vmem:[%s3 + $0xe8] sm:$0xff]
        %v857 = vld [vmem:[%s3 + $0xf0] sm:$0xff]
        %v858 = vld [vmem:[%s3 + $0xf8] sm:$0xff]
        %v859 = vld [vmem:[%s3 + $0x100] sm:$0xff]
        %v860 = vld [vmem:[%s3 + $0x108] sm:$0xff]
        %v861 = vld [vmem:[%s3 + $0x110] sm:$0xff]
        %v862 = vld [vmem:[%s3 + $0x118] sm:$0xff]
        %v863 = vld [vmem:[%s3 + $0x120] sm:$0xff]
        %v864 = vld [vmem:[%s3 + $0x128] sm:$0xff]
        %v865 = vld [vmem:[%s3 + $0x130] sm:$0xff]
        %v866 = vld [vmem:[%s3 + $0x138] sm:$0xff]
        %v867 = vld [vmem:[%s3 + $0x140] sm:$0xff]
        %v868 = vld [vmem:[%s3 + $0x148] sm:$0xff]
        %v869 = vld [vmem:[%s3 + $0x150] sm:$0xff]
        %v870 = vld [vmem:[%s3 + $0x158] sm:$0xff]
        %v871 = vld [vmem:[%s3 + $0x160] sm:$0xff]
        %v872 = vld [vmem:[%s3 + $0x168] sm:$0xff]
        %v873 = vld [vmem:[%s3 + $0x170] sm:$0xff]
        %v874 = vld [vmem:[%s3 + $0x178] sm:$0xff]
        %v875 = vld [vmem:[%s3 + $0x180] sm:$0xff]
        %v876 = vld [vmem:[%s3 + $0x188] sm:$0xff]
        %v877 = vld [vmem:[%s3 + $0x190] sm:$0xff]
        %v878 = vld [vmem:[%s3 + $0x198] sm:$0xff]
        %v879 = vld [vmem:[%s3 + $0x1a0] sm:$0xff]
        %v880 = vld [vmem:[%s3 + $0x1a8] sm:$0xff]
        %v881 = vld [vmem:[%s3 + $0x1b0] sm:$0xff]
        %v882 = vld [vmem:[%s3 + $0x1b8] sm:$0xff]
        %v883 = vld [vmem:[%s3 + $0x1c0] sm:$0xff]
        %v884 = vld [vmem:[%s3 + $0x1c8] sm:$0xff]
        %v885 = vld [vmem:[%s3 + $0x1d0] sm:$0xff]
        %v886 = vld [vmem:[%s3 + $0x1d8] sm:$0xff]
        %v887 = vld [vmem:[%s3 + $0x1e0] sm:$0xff]
        %v888 = vld [vmem:[%s3 + $0x1e8] sm:$0xff]
        %v889 = vld [vmem:[%s3 + $0x1f0] sm:$0xff]
        %v890 = vld [vmem:[%s3 + $0x1f8] sm:$0xff]
        %v891 = vld [vmem:[%s3 + $0x200] sm:$0xff]
        %v892 = vld [vmem:[%s3 + $0x208] sm:$0xff]
        %v893 = vld [vmem:[%s3 + $0x210] sm:$0xff]
        %v894 = vld [vmem:[%s3 + $0x218] sm:$0xff]
        %v895 = vld [vmem:[%s3 + $0x220] sm:$0xff]
        %v896 = vld [vmem:[%s3 + $0x228] sm:$0xff]
        %v897 = vld [vmem:[%s3 + $0x230] sm:$0xff]
        %v898 = vld [vmem:[%s3 + $0x238] sm:$0xff]
        %v899 = vld [vmem:[%s3 + $0x240] sm:$0xff]
        %v900 = vld [vmem:[%s3 + $0x248] sm:$0xff]
        %v901 = vld [vmem:[%s3 + $0x250] sm:$0xff]
        %v902 = vld [vmem:[%s3 + $0x258] sm:$0xff]
        %v903 = vld [vmem:[%s3 + $0x260] sm:$0xff]
        %v904 = vld [vmem:[%s3 + $0x268] sm:$0xff]
        %v905 = vld [vmem:[%s3 + $0x270] sm:$0xff]
        %v906 = vld [vmem:[%s3 + $0x278] sm:$0xff]
        %v907 = vld [vmem:[%s3 + $0x280] sm:$0xff]
        %v908 = vld [vmem:[%s3 + $0x288] sm:$0xff]
        %v909 = vld [vmem:[%s3 + $0x290] sm:$0xff]
        %v910 = vld [vmem:[%s3 + $0x298] sm:$0xff]
        %v911 = vld [vmem:[%s3 + $0x2a0] sm:$0xff]
        %v912 = vld [vmem:[%s3 + $0x2a8] sm:$0xff]
        %v913 = vld [vmem:[%s3 + $0x2b0] sm:$0xff]
        %v914 = vld [vmem:[%s3 + $0x2b8] sm:$0xff]
        %v915 = vld [vmem:[%s3 + $0x2c0] sm:$0xff]
        %v916 = vld [vmem:[%s3 + $0x2c8] sm:$0xff]
        %v1007 = vunpack.c.l.b16 %v827
        %v1008 = vunpack.c.h.b16 %v827
        %v1009 = vunpack.c.l.b16 %v828
        %v1010 = vunpack.c.h.b16 %v828
        %v1011 = vunpack.c.l.b16 %v829
        %v1012 = vunpack.c.h.b16 %v829
        %v1013 = vunpack.c.l.b16 %v830
        %v1014 = vunpack.c.h.b16 %v830
        %v1015 = vunpack.c.l.b16 %v831
        %v1016 = vunpack.c.h.b16 %v831
        %v1017 = vunpack.c.l.b16 %v832
        %v1018 = vunpack.c.h.b16 %v832
        %v1019 = vunpack.c.l.b16 %v833
        %v1020 = vunpack.c.h.b16 %v833
        %v1021 = vunpack.c.l.b16 %v834
        %v1022 = vunpack.c.h.b16 %v834
        %v1023 = vunpack.c.l.b16 %v835
        %v1024 = vunpack.c.h.b16 %v835
        %v1025 = vunpack.c.l.b16 %v836
        %v1026 = vunpack.c.h.b16 %v836
        %v1027 = vunpack.c.l.b16 %v837
        %v1028 = vunpack.c.h.b16 %v837
        %v1029 = vunpack.c.l.b16 %v838
        %v1030 = vunpack.c.h.b16 %v838
        %v1031 = vunpack.c.l.b16 %v839
        %v1032 = vunpack.c.h.b16 %v839
        %v1033 = vunpack.c.l.b16 %v840
        %v1034 = vunpack.c.h.b16 %v840
        %v1035 = vunpack.c.l.b16 %v841
        %v1036 = vunpack.c.h.b16 %v841
        %v1037 = vunpack.c.l.b16 %v842
        %v1038 = vunpack.c.h.b16 %v842
        %v1039 = vunpack.c.l.b16 %v843
        %v1040 = vunpack.c.h.b16 %v843
        %v1041 = vunpack.c.l.b16 %v844
        %v1042 = vunpack.c.h.b16 %v844
        %v1043 = vunpack.c.l.b16 %v845
        %v1044 = vunpack.c.h.b16 %v845
        %v1045 = vunpack.c.l.b16 %v846
        %v1046 = vunpack.c.h.b16 %v846
        %v1047 = vunpack.c.l.b16 %v847
        %v1048 = vunpack.c.h.b16 %v847
        %v1049 = vunpack.c.l.b16 %v848
        %v1050 = vunpack.c.h.b16 %v848
        %v1051 = vunpack.c.l.b16 %v849
        %v1052 = vunpack.c.h.b16 %v849
        %v1053 = vunpack.c.l.b16 %v850
        %v1054 = vunpack.c.h.b16 %v850
        %v1055 = vunpack.c.l.b16 %v851
        %v1056 = vunpack.c.h.b16 %v851
        %v1057 = vunpack.c.l.b16 %v852
        %v1058 = vunpack.c.h.b16 %v852
        %v1059 = vunpack.c.l.b16 %v853
        %v1060 = vunpack.c.h.b16 %v853
        %v1061 = vunpack.c.l.b16 %v854
        %v1062 = vunpack.c.h.b16 %v854
        %v1063 = vunpack.c.l.b16 %v855
        %v1064 = vunpack.c.h.b16 %v855
        %v1065 = vunpack.c.l.b16 %v856
        %v1066 = vunpack.c.h.b16 %v856
        %v1067 = vunpack.c.l.b16 %v857
        %v1068 = vunpack.c.h.b16 %v857
        %v1069 = vunpack.c.l.b16 %v858
        %v1070 = vunpack.c.h.b16 %v858
        %v1071 = vunpack.c.l.b16 %v859
        %v1072 = vunpack.c.h.b16 %v859
        %v1073 = vunpack.c.l.b16 %v860
        %v1074 = vunpack.c.h.b16 %v860
        %v1075 = vunpack.c.l.b16 %v861
        %v1076 = vunpack.c.h.b16 %v861
        %v1077 = vunpack.c.l.b16 %v862
        %v1078 = vunpack.c.h.b16 %v862
        %v1079 = vunpack.c.l.b16 %v863
        %v1080 = vunpack.c.h.b16 %v863
        %v1081 = vunpack.c.l.b16 %v864
        %v1082 = vunpack.c.h.b16 %v864
        %v1083 = vunpack.c.l.b16 %v865
        %v1084 = vunpack.c.h.b16 %v865
        %v1085 = vunpack.c.l.b16 %v866
        %v1086 = vunpack.c.h.b16 %v866
        %v1087 = vunpack.c.l.b16 %v867
        %v1088 = vunpack.c.h.b16 %v867
        %v1089 = vunpack.c.l.b16 %v868
        %v1090 = vunpack.c.h.b16 %v868
        %v1091 = vunpack.c.l.b16 %v869
        %v1092 = vunpack.c.h.b16 %v869
        %v1093 = vunpack.c.l.b16 %v870
        %v1094 = vunpack.c.h.b16 %v870
        %v1095 = vunpack.c.l.b16 %v871
        %v1096 = vunpack.c.h.b16 %v871
        %v1097 = vunpack.c.l.b16 %v872
        %v1098 = vunpack.c.h.b16 %v872
        %v1099 = vunpack.c.l.b16 %v873
        %v1100 = vunpack.c.h.b16 %v873
        %v1101 = vunpack.c.l.b16 %v874
        %v1102 = vunpack.c.h.b16 %v874
        %v1103 = vunpack.c.l.b16 %v875
        %v1104 = vunpack.c.h.b16 %v875
        %v1105 = vunpack.c.l.b16 %v876
        %v1106 = vunpack.c.h.b16 %v876
        %v1107 = vunpack.c.l.b16 %v877
        %v1108 = vunpack.c.h.b16 %v877
        %v1109 = vunpack.c.l.b16 %v878
        %v1110 = vunpack.c.h.b16 %v878
        %v1111 = vunpack.c.l.b16 %v879
        %v1112 = vunpack.c.h.b16 %v879
        %v1113 = vunpack.c.l.b16 %v880
        %v1114 = vunpack.c.h.b16 %v880
        %v1115 = vunpack.c.l.b16 %v881
        %v1116 = vunpack.c.h.b16 %v881
        %v1117 = vunpack.c.l.b16 %v882
        %v1118 = vunpack.c.h.b16 %v882
        %v1119 = vunpack.c.l.b16 %v883
        %v1120 = vunpack.c.h.b16 %v883
        %v1121 = vunpack.c.l.b16 %v884
        %v1122 = vunpack.c.h.b16 %v884
        %v1123 = vunpack.c.l.b16 %v885
        %v1124 = vunpack.c.h.b16 %v885
        %v1125 = vunpack.c.l.b16 %v886
        %v1126 = vunpack.c.h.b16 %v886
        %v1127 = vunpack.c.l.b16 %v887
        %v1128 = vunpack.c.h.b16 %v887
        %v1129 = vunpack.c.l.b16 %v888
        %v1130 = vunpack.c.h.b16 %v888
        %v1131 = vunpack.c.l.b16 %v889
        %v1132 = vunpack.c.h.b16 %v889
        %v1133 = vunpack.c.l.b16 %v890
        %v1134 = vunpack.c.h.b16 %v890
        %v1135 = vunpack.c.l.b16 %v891
        %v1136 = vunpack.c.h.b16 %v891
        %v1137 = vunpack.c.l.b16 %v892
        %v1138 = vunpack.c.h.b16 %v892
        %v1139 = vunpack.c.l.b16 %v893
        %v1140 = vunpack.c.h.b16 %v893
        %v1141 = vunpack.c.l.b16 %v894
        %v1142 = vunpack.c.h.b16 %v894
        %v1143 = vunpack.c.l.b16 %v895
        %v1144 = vunpack.c.h.b16 %v895
        %v1145 = vunpack.c.l.b16 %v896
        %v1146 = vunpack.c.h.b16 %v896
        %v1147 = vunpack.c.l.b16 %v897
        %v1148 = vunpack.c.h.b16 %v897
        %v1149 = vunpack.c.l.b16 %v898
        %v1150 = vunpack.c.h.b16 %v898
        %v1151 = vunpack.c.l.b16 %v899
        %v1152 = vunpack.c.h.b16 %v899
        %v1153 = vunpack.c.l.b16 %v900
        %v1154 = vunpack.c.h.b16 %v900
        %v1155 = vunpack.c.l.b16 %v901
        %v1156 = vunpack.c.h.b16 %v901
        %v1157 = vunpack.c.l.b16 %v902
        %v1158 = vunpack.c.h.b16 %v902
        %v1159 = vunpack.c.l.b16 %v903
        %v1160 = vunpack.c.h.b16 %v903
        %v1161 = vunpack.c.l.b16 %v904
        %v1162 = vunpack.c.h.b16 %v904
        %v1163 = vunpack.c.l.b16 %v905
        %v1164 = vunpack.c.h.b16 %v905
        %v1165 = vunpack.c.l.b16 %v906
        %v1166 = vunpack.c.h.b16 %v906
        %v1167 = vunpack.c.l.b16 %v907
        %v1168 = vunpack.c.h.b16 %v907
        %v1169 = vunpack.c.l.b16 %v908
        %v1170 = vunpack.c.h.b16 %v908
        %v1171 = vunpack.c.l.b16 %v909
        %v1172 = vunpack.c.h.b16 %v909
        %v1173 = vunpack.c.l.b16 %v910
        %v1174 = vunpack.c.h.b16 %v910
        %v1175 = vunpack.c.l.b16 %v911
        %v1176 = vunpack.c.h.b16 %v911
        %v1177 = vunpack.c.l.b16 %v912
        %v1178 = vunpack.c.h.b16 %v912
        %v1179 = vunpack.c.l.b16 %v913
        %v1180 = vunpack.c.h.b16 %v913
        %v1181 = vunpack.c.l.b16 %v914
        %v1182 = vunpack.c.h.b16 %v914
        %v1183 = vunpack.c.l.b16 %v915
        %v1184 = vunpack.c.h.b16 %v915
        %v1185 = vunpack.c.l.b16 %v916
        %v1186 = vunpack.c.h.b16 %v916
        %v1187 = vpack.c.b16 %v1017, %v1007
        %v1188 = vpack.c.b16 %v1018, %v1008
        %v1189 = vpack.c.b16 %v1019, %v1009
        %v1190 = vpack.c.b16 %v1020, %v1010
        %v1191 = vpack.c.b16 %v1021, %v1011
        %v1192 = vpack.c.b16 %v1022, %v1012
        %v1193 = vpack.c.b16 %v1023, %v1013
        %v1194 = vpack.c.b16 %v1024, %v1014
        %v1195 = vpack.c.b16 %v1025, %v1015
        %v1196 = vpack.c.b16 %v1026, %v1016
        %v1197 = vpack.c.b16 %v1037, %v1027
        %v1198 = vpack.c.b16 %v1038, %v1028
        %v1199 = vpack.c.b16 %v1039, %v1029
        %v1200 = vpack.c.b16 %v1040, %v1030
        %v1201 = vpack.c.b16 %v1041, %v1031
        %v1202 = vpack.c.b16 %v1042, %v1032
        %v1203 = vpack.c.b16 %v1043, %v1033
        %v1204 = vpack.c.b16 %v1044, %v1034
        %v1205 = vpack.c.b16 %v1045, %v1035
        %v1206 = vpack.c.b16 %v1046, %v1036
        %v1207 = vpack.c.b16 %v1057, %v1047
        %v1208 = vpack.c.b16 %v1058, %v1048
        %v1209 = vpack.c.b16 %v1059, %v1049
        %v1210 = vpack.c.b16 %v1060, %v1050
        %v1211 = vpack.c.b16 %v1061, %v1051
        %v1212 = vpack.c.b16 %v1062, %v1052
        %v1213 = vpack.c.b16 %v1063, %v1053
        %v1214 = vpack.c.b16 %v1064, %v1054
        %v1215 = vpack.c.b16 %v1065, %v1055
        %v1216 = vpack.c.b16 %v1066, %v1056
        %v1217 = vpack.c.b16 %v1077, %v1067
        %v1218 = vpack.c.b16 %v1078, %v1068
        %v1219 = vpack.c.b16 %v1079, %v1069
        %v1220 = vpack.c.b16 %v1080, %v1070
        %v1221 = vpack.c.b16 %v1081, %v1071
        %v1222 = vpack.c.b16 %v1082, %v1072
        %v1223 = vpack.c.b16 %v1083, %v1073
        %v1224 = vpack.c.b16 %v1084, %v1074
        %v1225 = vpack.c.b16 %v1085, %v1075
        %v1226 = vpack.c.b16 %v1086, %v1076
        %v1227 = vpack.c.b16 %v1097, %v1087
        %v1228 = vpack.c.b16 %v1098, %v1088
        %v1229 = vpack.c.b16 %v1099, %v1089
        %v1230 = vpack.c.b16 %v1100, %v1090
        %v1231 = vpack.c.b16 %v1101, %v1091
        %v1232 = vpack.c.b16 %v1102, %v1092
        %v1233 = vpack.c.b16 %v1103, %v1093
        %v1234 = vpack.c.b16 %v1104, %v1094
        %v1235 = vpack.c.b16 %v1105, %v1095
        %v1236 = vpack.c.b16 %v1106, %v1096
        %v1237 = vpack.c.b16 %v1117, %v1107
        %v1238 = vpack.c.b16 %v1118, %v1108
        %v1239 = vpack.c.b16 %v1119, %v1109
        %v1240 = vpack.c.b16 %v1120, %v1110
        %v1241 = vpack.c.b16 %v1121, %v1111
        %v1242 = vpack.c.b16 %v1122, %v1112
        %v1243 = vpack.c.b16 %v1123, %v1113
        %v1244 = vpack.c.b16 %v1124, %v1114
        %v1245 = vpack.c.b16 %v1125, %v1115
        %v1246 = vpack.c.b16 %v1126, %v1116
        %v1247 = vpack.c.b16 %v1137, %v1127
        %v1248 = vpack.c.b16 %v1138, %v1128
        %v1249 = vpack.c.b16 %v1139, %v1129
        %v1250 = vpack.c.b16 %v1140, %v1130
        %v1251 = vpack.c.b16 %v1141, %v1131
        %v1252 = vpack.c.b16 %v1142, %v1132
        %v1253 = vpack.c.b16 %v1143, %v1133
        %v1254 = vpack.c.b16 %v1144, %v1134
        %v1255 = vpack.c.b16 %v1145, %v1135
        %v1256 = vpack.c.b16 %v1146, %v1136
        %v1257 = vpack.c.b16 %v1157, %v1147
        %v1258 = vpack.c.b16 %v1158, %v1148
        %v1259 = vpack.c.b16 %v1159, %v1149
        %v1260 = vpack.c.b16 %v1160, %v1150
        %v1261 = vpack.c.b16 %v1161, %v1151
        %v1262 = vpack.c.b16 %v1162, %v1152
        %v1263 = vpack.c.b16 %v1163, %v1153
        %v1264 = vpack.c.b16 %v1164, %v1154
        %v1265 = vpack.c.b16 %v1165, %v1155
        %v1266 = vpack.c.b16 %v1166, %v1156
        %v1267 = vpack.c.b16 %v1177, %v1167
        %v1268 = vpack.c.b16 %v1178, %v1168
        %v1269 = vpack.c.b16 %v1179, %v1169
        %v1270 = vpack.c.b16 %v1180, %v1170
        %v1271 = vpack.c.b16 %v1181, %v1171
        %v1272 = vpack.c.b16 %v1182, %v1172
        %v1273 = vpack.c.b16 %v1183, %v1173
        %v1274 = vpack.c.b16 %v1184, %v1174
        %v1275 = vpack.c.b16 %v1185, %v1175
        %v1276 = vpack.c.b16 %v1186, %v1176
        %vm1367 = vcmask 130048
        %v1369 = vsel %vm1367, %v810, 0
        %v1372 = vsel %vm1367, %v812, 0
        %v1375 = vsel %vm1367, %v814, 0
        %v1378 = vsel %vm1367, %v816, 0
        %v1381 = vsel %vm1367, %v818, 0
        %v1384 = vsel %vm1367, %v820, 0
        %v1387 = vsel %vm1367, %v822, 0
        %v1390 = vsel %vm1367, %v824, 0
        %v1393 = vsel %vm1367, %v826, 0
        %1395 = vmatprep.subr.bf16.mxu0 %v1188
        %1396 = vmatpush1.bf16.msra.mxu0 %v1187
        %1397 = vmatprep.subr.bf16.mxu0 %v1198
        %1398 = vmatpush1.bf16.msra.mxu0 %v1197
        %1399 = vmatprep.subr.bf16.mxu0 %v1208
        %1400 = vmatpush1.bf16.msra.mxu0 %v1207
        %1401 = vmatprep.subr.bf16.mxu0 %v1218
        %1402 = vmatpush1.bf16.msra.mxu0 %v1217
        %1403 = vmatprep.subr.bf16.mxu0 %v1228
        %1404 = vmatpush1.bf16.msra.mxu0 %v1227
        %1405 = vmatprep.subr.bf16.mxu0 %v1238
        %1406 = vmatpush1.bf16.msra.mxu0 %v1237
        %1407 = vmatprep.subr.bf16.mxu0 %v1248
        %1408 = vmatpush1.bf16.msra.mxu0 %v1247
        %1409 = vmatprep.subr.bf16.mxu0 %v1258
        %1410 = vmatpush1.bf16.msra.mxu0 %v1257
        %1411 = vmatprep.subr.bf16.mxu0 %v1268
        %1412 = vmatpush1.bf16.msra.mxu0 %v1267
        %1413 = vmatprep.subr.bf16.mxu0 0
        %1414 = vmatpush1.bf16.msra.mxu0 0
        %1415 = vmatprep.subr.bf16.mxu0 0
        %1416 = vmatpush1.bf16.msra.mxu0 0
        %1417 = vmatprep.subr.bf16.mxu0 0
        %1418 = vmatpush1.bf16.msra.mxu0 0
        %1419 = vmatprep.subr.bf16.mxu0 0
        %1420 = vmatpush1.bf16.msra.mxu0 0
        %1421 = vmatprep.subr.bf16.mxu0 0
        %1422 = vmatpush1.bf16.msra.mxu0 0
        %1423 = vmatprep.subr.bf16.mxu0 0
        %1424 = vmatpush1.bf16.msra.mxu0 0
        %1425 = vmatprep.subr.bf16.mxu0 0
        %1426 = vmatpush1.bf16.msra.mxu0 0
        %1427 = vmatprep.mubr.bf16.mxu0 %v1369
        %1428 = vmatmul.mubr.bf16.gmra.mrb[0].mxu0 %v809
        %v1429 = vpop.f32.mrb[0].mxu0
        %v1430 = vadd.f32 0.0, %v1429
        %v1431 = vpop.f32.mrb[0].mxu0
        %v1432 = vadd.f32 0.0, %v1431
        %v1433 = vpop.f32.mrb[0].mxu0
        %v1434 = vadd.f32 0.0, %v1433
        %v1435 = vpop.f32.mrb[0].mxu0
        %v1436 = vadd.f32 0.0, %v1435
        %1437 = vmatprep.mubr.bf16.mxu0 %v1372
        %1438 = vmatmul.mubr.bf16.gmra.mrb[0].mxu0 %v811
        %v1439 = vpop.f32.mrb[0].mxu0
        %v1440 = vadd.f32 0.0, %v1439
        %v1441 = vpop.f32.mrb[0].mxu0
        %v1442 = vadd.f32 0.0, %v1441
        %v1443 = vpop.f32.mrb[0].mxu0
        %v1444 = vadd.f32 0.0, %v1443
        %v1445 = vpop.f32.mrb[0].mxu0
        %v1446 = vadd.f32 0.0, %v1445
        %1447 = vmatprep.mubr.bf16.mxu0 %v1375
        %1448 = vmatmul.mubr.bf16.gmra.mrb[0].mxu0 %v813
        %v1449 = vpop.f32.mrb[0].mxu0
        %v1450 = vadd.f32 0.0, %v1449
        %v1451 = vpop.f32.mrb[0].mxu0
        %v1452 = vadd.f32 0.0, %v1451
        %v1453 = vpop.f32.mrb[0].mxu0
        %v1454 = vadd.f32 0.0, %v1453
        %v1455 = vpop.f32.mrb[0].mxu0
        %v1456 = vadd.f32 0.0, %v1455
        %1457 = vmatprep.mubr.bf16.mxu0 %v1378
        %1458 = vmatmul.mubr.bf16.gmra.mrb[0].mxu0 %v815
        %v1459 = vpop.f32.mrb[0].mxu0
        %v1460 = vadd.f32 0.0, %v1459
        %v1461 = vpop.f32.mrb[0].mxu0
        %v1462 = vadd.f32 0.0, %v1461
        %v1463 = vpop.f32.mrb[0].mxu0
        %v1464 = vadd.f32 0.0, %v1463
        %v1465 = vpop.f32.mrb[0].mxu0
        %v1466 = vadd.f32 0.0, %v1465
        %1467 = vmatprep.mubr.bf16.mxu0 %v1381
        %1468 = vmatmul.mubr.bf16.gmra.mrb[0].mxu0 %v817
        %v1469 = vpop.f32.mrb[0].mxu0
        %v1470 = vadd.f32 0.0, %v1469
        %v1471 = vpop.f32.mrb[0].mxu0
        %v1472 = vadd.f32 0.0, %v1471
        %v1473 = vpop.f32.mrb[0].mxu0
        %v1474 = vadd.f32 0.0, %v1473
        %v1475 = vpop.f32.mrb[0].mxu0
        %v1476 = vadd.f32 0.0, %v1475
        %1477 = vmatprep.mubr.bf16.mxu0 %v1384
        %1478 = vmatmul.mubr.bf16.gmra.mrb[0].mxu0 %v819
        %v1479 = vpop.f32.mrb[0].mxu0
        %v1480 = vadd.f32 0.0, %v1479
        %v1481 = vpop.f32.mrb[0].mxu0
        %v1482 = vadd.f32 0.0, %v1481
        %v1483 = vpop.f32.mrb[0].mxu0
        %v1484 = vadd.f32 0.0, %v1483
        %v1485 = vpop.f32.mrb[0].mxu0
        %v1486 = vadd.f32 0.0, %v1485
        %1487 = vmatprep.mubr.bf16.mxu0 %v1387
        %1488 = vmatmul.mubr.bf16.gmra.mrb[0].mxu0 %v821
        %v1489 = vpop.f32.mrb[0].mxu0
        %v1490 = vadd.f32 0.0, %v1489
        %v1491 = vpop.f32.mrb[0].mxu0
        %v1492 = vadd.f32 0.0, %v1491
        %v1493 = vpop.f32.mrb[0].mxu0
        %v1494 = vadd.f32 0.0, %v1493
        %v1495 = vpop.f32.mrb[0].mxu0
        %v1496 = vadd.f32 0.0, %v1495
        %1497 = vmatprep.mubr.bf16.mxu0 %v1390
        %1498 = vmatmul.mubr.bf16.gmra.mrb[0].mxu0 %v823
        %v1499 = vpop.f32.mrb[0].mxu0
        %v1500 = vpop.f32.mrb[0].mxu0
        %v1501 = vpop.f32.mrb[0].mxu0
        %v1502 = vpop.f32.mrb[0].mxu0
        %1503 = vmatprep.mubr.bf16.mxu0 %v1393
        %1504 = vmatmul.mubr.bf16.gmra.mrb[0].mxu0 %v825
        %v1505 = vpop.f32.mrb[0].mxu0
        %v1506 = vpop.f32.mrb[0].mxu0
        %v1507 = vpop.f32.mrb[0].mxu0
        %v1508 = vpop.f32.mrb[0].mxu0
        %1509 = vdwg.mxu0
        %1510 = vmatprep.subr.bf16.mxu0 %v1190
        %1511 = vmatpush1.bf16.msra.mxu0 %v1189
        %1512 = vmatprep.subr.bf16.mxu0 %v1200
        %1513 = vmatpush1.bf16.msra.mxu0 %v1199
        %1514 = vmatprep.subr.bf16.mxu0 %v1210
        %1515 = vmatpush1.bf16.msra.mxu0 %v1209
        %1516 = vmatprep.subr.bf16.mxu0 %v1220
        %1517 = vmatpush1.bf16.msra.mxu0 %v1219
        %1518 = vmatprep.subr.bf16.mxu0 %v1230
        %1519 = vmatpush1.bf16.msra.mxu0 %v1229
        %1520 = vmatprep.subr.bf16.mxu0 %v1240
        %1521 = vmatpush1.bf16.msra.mxu0 %v1239
        %1522 = vmatprep.subr.bf16.mxu0 %v1250
        %1523 = vmatpush1.bf16.msra.mxu0 %v1249
        %1524 = vmatprep.subr.bf16.mxu0 %v1260
        %1525 = vmatpush1.bf16.msra.mxu0 %v1259
        %1526 = vmatprep.subr.bf16.mxu0 %v1270
        %1527 = vmatpush1.bf16.msra.mxu0 %v1269
        %1528 = vmatprep.subr.bf16.mxu0 0
        %1529 = vmatpush1.bf16.msra.mxu0 0
        %1530 = vmatprep.subr.bf16.mxu0 0
        %1531 = vmatpush1.bf16.msra.mxu0 0
        %1532 = vmatprep.subr.bf16.mxu0 0
        %1533 = vmatpush1.bf16.msra.mxu0 0
        %1534 = vmatprep.subr.bf16.mxu0 0
        %1535 = vmatpush1.bf16.msra.mxu0 0
        %1536 = vmatprep.subr.bf16.mxu0 0
        %1537 = vmatpush1.bf16.msra.mxu0 0
        %1538 = vmatprep.subr.bf16.mxu0 0
        %1539 = vmatpush1.bf16.msra.mxu0 0
        %1540 = vmatprep.subr.bf16.mxu0 0
        %1541 = vmatpush1.bf16.msra.mxu0 0
        %1542 = vmatprep.mubr.bf16.mxu0 %v1369
        %1543 = vmatmul.mubr.bf16.gmra.mrb[0].mxu0 %v809
        %v1544 = vpop.f32.mrb[0].mxu0
        %v1545 = vpop.f32.mrb[0].mxu0
        %v1546 = vpop.f32.mrb[0].mxu0
        %v1547 = vadd.f32 0.0, %v1546
        %v1548 = vpop.f32.mrb[0].mxu0
        %v1549 = vadd.f32 0.0, %v1548
        %1550 = vmatprep.mubr.bf16.mxu0 %v1372
        %1551 = vmatmul.mubr.bf16.gmra.mrb[0].mxu0 %v811
        %v1552 = vpop.f32.mrb[0].mxu0
        %v1553 = vadd.f32 0.0, %v1552
        %v1554 = vpop.f32.mrb[0].mxu0
        %v1555 = vadd.f32 0.0, %v1554
        %v1556 = vpop.f32.mrb[0].mxu0
        %v1557 = vadd.f32 0.0, %v1556
        %v1558 = vpop.f32.mrb[0].mxu0
        %v1559 = vadd.f32 0.0, %v1558
        %1560 = vmatprep.mubr.bf16.mxu0 %v1375
        %1561 = vmatmul.mubr.bf16.gmra.mrb[0].mxu0 %v813
        %v1562 = vpop.f32.mrb[0].mxu0
        %v1563 = vadd.f32 0.0, %v1562
        %v1564 = vpop.f32.mrb[0].mxu0
        %v1565 = vadd.f32 0.0, %v1564
        %v1566 = vpop.f32.mrb[0].mxu0
        %v1567 = vadd.f32 0.0, %v1566
        %v1568 = vpop.f32.mrb[0].mxu0
        %v1569 = vadd.f32 0.0, %v1568
        %1570 = vmatprep.mubr.bf16.mxu0 %v1378
        %1571 = vmatmul.mubr.bf16.gmra.mrb[0].mxu0 %v815
        %v1572 = vpop.f32.mrb[0].mxu0
        %v1573 = vadd.f32 0.0, %v1572
        %v1574 = vpop.f32.mrb[0].mxu0
        %v1575 = vadd.f32 0.0, %v1574
        %v1576 = vpop.f32.mrb[0].mxu0
        %v1577 = vadd.f32 0.0, %v1576
        %v1578 = vpop.f32.mrb[0].mxu0
        %v1579 = vadd.f32 0.0, %v1578
        %1580 = vmatprep.mubr.bf16.mxu0 %v1381
        %1581 = vmatmul.mubr.bf16.gmra.mrb[0].mxu0 %v817
        %v1582 = vpop.f32.mrb[0].mxu0
        %v1583 = vadd.f32 0.0, %v1582
        %v1584 = vpop.f32.mrb[0].mxu0
        %v1585 = vadd.f32 0.0, %v1584
        %v1586 = vpop.f32.mrb[0].mxu0
        %v1587 = vadd.f32 0.0, %v1586
        %v1588 = vpop.f32.mrb[0].mxu0
        %v1589 = vadd.f32 0.0, %v1588
        %1590 = vmatprep.mubr.bf16.mxu0 %v1384
        %1591 = vmatmul.mubr.bf16.gmra.mrb[0].mxu0 %v819
        %v1592 = vpop.f32.mrb[0].mxu0
        %v1593 = vadd.f32 0.0, %v1592
        %v1594 = vpop.f32.mrb[0].mxu0
        %v1595 = vadd.f32 0.0, %v1594
        %v1596 = vpop.f32.mrb[0].mxu0
        %v1597 = vadd.f32 0.0, %v1596
        %v1598 = vpop.f32.mrb[0].mxu0
        %v1599 = vadd.f32 0.0, %v1598
        %1600 = vmatprep.mubr.bf16.mxu0 %v1387
        %1601 = vmatmul.mubr.bf16.gmra.mrb[0].mxu0 %v821
        %v1602 = vpop.f32.mrb[0].mxu0
        %v1603 = vadd.f32 0.0, %v1602
        %v1604 = vpop.f32.mrb[0].mxu0
        %v1605 = vadd.f32 0.0, %v1604
        %v1606 = vpop.f32.mrb[0].mxu0
        %v1607 = vadd.f32 0.0, %v1606
        %v1608 = vpop.f32.mrb[0].mxu0
        %v1609 = vadd.f32 0.0, %v1608
        %1610 = vmatprep.mubr.bf16.mxu0 %v1390
        %1611 = vmatmul.mubr.bf16.gmra.mrb[0].mxu0 %v823
        %v1612 = vpop.f32.mrb[0].mxu0
        %v1613 = vadd.f32 0.0, %v1612
        %v1614 = vpop.f32.mrb[0].mxu0
        %v1615 = vadd.f32 0.0, %v1614
        %v1616 = vpop.f32.mrb[0].mxu0
        %v1617 = vpop.f32.mrb[0].mxu0
        %1618 = vmatprep.mubr.bf16.mxu0 %v1393
        %1619 = vmatmul.mubr.bf16.gmra.mrb[0].mxu0 %v825
        %v1620 = vpop.f32.mrb[0].mxu0
        %v1621 = vpop.f32.mrb[0].mxu0
        %v1622 = vpop.f32.mrb[0].mxu0
        %v1623 = vpop.f32.mrb[0].mxu0
        %1624 = vdwg.mxu0
        %1625 = vmatprep.subr.bf16.mxu0 %v1192
        %1626 = vmatpush1.bf16.msra.mxu0 %v1191
        %1627 = vmatprep.subr.bf16.mxu0 %v1202
        %1628 = vmatpush1.bf16.msra.mxu0 %v1201
        %1629 = vmatprep.subr.bf16.mxu0 %v1212
        %1630 = vmatpush1.bf16.msra.mxu0 %v1211
        %1631 = vmatprep.subr.bf16.mxu0 %v1222
        %1632 = vmatpush1.bf16.msra.mxu0 %v1221
        %1633 = vmatprep.subr.bf16.mxu0 %v1232
        %1634 = vmatpush1.bf16.msra.mxu0 %v1231
        %1635 = vmatprep.subr.bf16.mxu0 %v1242
        %1636 = vmatpush1.bf16.msra.mxu0 %v1241
        %1637 = vmatprep.subr.bf16.mxu0 %v1252
        %1638 = vmatpush1.bf16.msra.mxu0 %v1251
        %1639 = vmatprep.subr.bf16.mxu0 %v1262
        %1640 = vmatpush1.bf16.msra.mxu0 %v1261
        %1641 = vmatprep.subr.bf16.mxu0 %v1272
        %1642 = vmatpush1.bf16.msra.mxu0 %v1271
        %1643 = vmatprep.subr.bf16.mxu0 0
        %1644 = vmatpush1.bf16.msra.mxu0 0
        %1645 = vmatprep.subr.bf16.mxu0 0
        %1646 = vmatpush1.bf16.msra.mxu0 0
        %1647 = vmatprep.subr.bf16.mxu0 0
        %1648 = vmatpush1.bf16.msra.mxu0 0
        %1649 = vmatprep.subr.bf16.mxu0 0
        %1650 = vmatpush1.bf16.msra.mxu0 0
        %1651 = vmatprep.subr.bf16.mxu0 0
        %1652 = vmatpush1.bf16.msra.mxu0 0
        %1653 = vmatprep.subr.bf16.mxu0 0
        %1654 = vmatpush1.bf16.msra.mxu0 0
        %1655 = vmatprep.subr.bf16.mxu0 0
        %1656 = vmatpush1.bf16.msra.mxu0 0
        %1657 = vmatprep.mubr.bf16.mxu0 %v1369
        %1658 = vmatmul.mubr.bf16.gmra.mrb[0].mxu0 %v809
        %v1659 = vpop.f32.mrb[0].mxu0
        %v1660 = vpop.f32.mrb[0].mxu0
        %v1661 = vpop.f32.mrb[0].mxu0
        %v1662 = vpop.f32.mrb[0].mxu0
        %1663 = vmatprep.mubr.bf16.mxu0 %v1372
        %1664 = vmatmul.mubr.bf16.gmra.mrb[0].mxu0 %v811
        %v1665 = vpop.f32.mrb[0].mxu0
        %v1666 = vadd.f32 0.0, %v1665
        %v1667 = vpop.f32.mrb[0].mxu0
        %v1668 = vadd.f32 0.0, %v1667
        %v1669 = vpop.f32.mrb[0].mxu0
        %v1670 = vadd.f32 0.0, %v1669
        %v1671 = vpop.f32.mrb[0].mxu0
        %v1672 = vadd.f32 0.0, %v1671
        %1673 = vmatprep.mubr.bf16.mxu0 %v1375
        %1674 = vmatmul.mubr.bf16.gmra.mrb[0].mxu0 %v813
        %v1675 = vpop.f32.mrb[0].mxu0
        %v1676 = vadd.f32 0.0, %v1675
        %v1677 = vpop.f32.mrb[0].mxu0
        %v1678 = vadd.f32 0.0, %v1677
        %v1679 = vpop.f32.mrb[0].mxu0
        %v1680 = vadd.f32 0.0, %v1679
        %v1681 = vpop.f32.mrb[0].mxu0
        %v1682 = vadd.f32 0.0, %v1681
        %1683 = vmatprep.mubr.bf16.mxu0 %v1378
        %1684 = vmatmul.mubr.bf16.gmra.mrb[0].mxu0 %v815
        %v1685 = vpop.f32.mrb[0].mxu0
        %v1686 = vadd.f32 0.0, %v1685
        %v1687 = vpop.f32.mrb[0].mxu0
        %v1688 = vadd.f32 0.0, %v1687
        %v1689 = vpop.f32.mrb[0].mxu0
        %v1690 = vadd.f32 0.0, %v1689
        %v1691 = vpop.f32.mrb[0].mxu0
        %v1692 = vadd.f32 0.0, %v1691
        %1693 = vmatprep.mubr.bf16.mxu0 %v1381
        %1694 = vmatmul.mubr.bf16.gmra.mrb[0].mxu0 %v817
        %v1695 = vpop.f32.mrb[0].mxu0
        %v1696 = vadd.f32 0.0, %v1695
        %v1697 = vpop.f32.mrb[0].mxu0
        %v1698 = vadd.f32 0.0, %v1697
        %v1699 = vpop.f32.mrb[0].mxu0
        %v1700 = vadd.f32 0.0, %v1699
        %v1701 = vpop.f32.mrb[0].mxu0
        %v1702 = vadd.f32 0.0, %v1701
        %1703 = vmatprep.mubr.bf16.mxu0 %v1384
        %1704 = vmatmul.mubr.bf16.gmra.mrb[0].mxu0 %v819
        %v1705 = vpop.f32.mrb[0].mxu0
        %v1706 = vadd.f32 0.0, %v1705
        %v1707 = vpop.f32.mrb[0].mxu0
        %v1708 = vadd.f32 0.0, %v1707
        %v1709 = vpop.f32.mrb[0].mxu0
        %v1710 = vadd.f32 0.0, %v1709
        %v1711 = vpop.f32.mrb[0].mxu0
        %v1712 = vadd.f32 0.0, %v1711
        %1713 = vmatprep.mubr.bf16.mxu0 %v1387
        %1714 = vmatmul.mubr.bf16.gmra.mrb[0].mxu0 %v821
        %v1715 = vpop.f32.mrb[0].mxu0
        %v1716 = vadd.f32 0.0, %v1715
        %v1717 = vpop.f32.mrb[0].mxu0
        %v1718 = vadd.f32 0.0, %v1717
        %v1719 = vpop.f32.mrb[0].mxu0
        %v1720 = vadd.f32 0.0, %v1719
        %v1721 = vpop.f32.mrb[0].mxu0
        %v1722 = vadd.f32 0.0, %v1721
        %1723 = vmatprep.mubr.bf16.mxu0 %v1390
        %1724 = vmatmul.mubr.bf16.gmra.mrb[0].mxu0 %v823
        %v1725 = vpop.f32.mrb[0].mxu0
        %v1726 = vadd.f32 0.0, %v1725
        %v1727 = vpop.f32.mrb[0].mxu0
        %v1728 = vadd.f32 0.0, %v1727
        %v1729 = vpop.f32.mrb[0].mxu0
        %v1730 = vadd.f32 0.0, %v1729
        %v1731 = vpop.f32.mrb[0].mxu0
        %v1732 = vadd.f32 0.0, %v1731
        %1733 = vmatprep.mubr.bf16.mxu0 %v1393
        %1734 = vmatmul.mubr.bf16.gmra.mrb[0].mxu0 %v825
        %v1735 = vpop.f32.mrb[0].mxu0
        %v1736 = vpop.f32.mrb[0].mxu0
        %v1737 = vpop.f32.mrb[0].mxu0
        %v1738 = vpop.f32.mrb[0].mxu0
        %1739 = vdwg.mxu0
        %1740 = vmatprep.subr.bf16.mxu0 %v1194
        %1741 = vmatpush1.bf16.msra.mxu0 %v1193
        %1742 = vmatprep.subr.bf16.mxu0 %v1204
        %1743 = vmatpush1.bf16.msra.mxu0 %v1203
        %1744 = vmatprep.subr.bf16.mxu0 %v1214
        %1745 = vmatpush1.bf16.msra.mxu0 %v1213
        %1746 = vmatprep.subr.bf16.mxu0 %v1224
        %1747 = vmatpush1.bf16.msra.mxu0 %v1223
        %1748 = vmatprep.subr.bf16.mxu0 %v1234
        %1749 = vmatpush1.bf16.msra.mxu0 %v1233
        %1750 = vmatprep.subr.bf16.mxu0 %v1244
        %1751 = vmatpush1.bf16.msra.mxu0 %v1243
        %1752 = vmatprep.subr.bf16.mxu0 %v1254
        %1753 = vmatpush1.bf16.msra.mxu0 %v1253
        %1754 = vmatprep.subr.bf16.mxu0 %v1264
        %1755 = vmatpush1.bf16.msra.mxu0 %v1263
        %1756 = vmatprep.subr.bf16.mxu0 %v1274
        %1757 = vmatpush1.bf16.msra.mxu0 %v1273
        %1758 = vmatprep.subr.bf16.mxu0 0
        %1759 = vmatpush1.bf16.msra.mxu0 0
        %1760 = vmatprep.subr.bf16.mxu0 0
        %1761 = vmatpush1.bf16.msra.mxu0 0
        %1762 = vmatprep.subr.bf16.mxu0 0
        %1763 = vmatpush1.bf16.msra.mxu0 0
        %1764 = vmatprep.subr.bf16.mxu0 0
        %1765 = vmatpush1.bf16.msra.mxu0 0
        %1766 = vmatprep.subr.bf16.mxu0 0
        %1767 = vmatpush1.bf16.msra.mxu0 0
        %1768 = vmatprep.subr.bf16.mxu0 0
        %1769 = vmatpush1.bf16.msra.mxu0 0
        %1770 = vmatprep.subr.bf16.mxu0 0
        %1771 = vmatpush1.bf16.msra.mxu0 0
        %1772 = vmatprep.mubr.bf16.mxu0 %v1369
        %1773 = vmatmul.mubr.bf16.gmra.mrb[0].mxu0 %v809
        %v1774 = vpop.f32.mrb[0].mxu0
        %v1775 = vpop.f32.mrb[0].mxu0
        %v1776 = vpop.f32.mrb[0].mxu0
        %v1777 = vpop.f32.mrb[0].mxu0
        %1778 = vmatprep.mubr.bf16.mxu0 %v1372
        %1779 = vmatmul.mubr.bf16.gmra.mrb[0].mxu0 %v811
        %v1780 = vpop.f32.mrb[0].mxu0
        %v1781 = vpop.f32.mrb[0].mxu0
        %v1782 = vpop.f32.mrb[0].mxu0
        %v1783 = vadd.f32 0.0, %v1782
        %v1784 = vpop.f32.mrb[0].mxu0
        %v1785 = vadd.f32 0.0, %v1784
        %1786 = vmatprep.mubr.bf16.mxu0 %v1375
        %1787 = vmatmul.mubr.bf16.gmra.mrb[0].mxu0 %v813
        %v1788 = vpop.f32.mrb[0].mxu0
        %v1789 = vadd.f32 0.0, %v1788
        %v1790 = vpop.f32.mrb[0].mxu0
        %v1791 = vadd.f32 0.0, %v1790
        %v1792 = vpop.f32.mrb[0].mxu0
        %v1793 = vadd.f32 0.0, %v1792
        %v1794 = vpop.f32.mrb[0].mxu0
        %v1795 = vadd.f32 0.0, %v1794
        %1796 = vmatprep.mubr.bf16.mxu0 %v1378
        %1797 = vmatmul.mubr.bf16.gmra.mrb[0].mxu0 %v815
        %v1798 = vpop.f32.mrb[0].mxu0
        %v1799 = vadd.f32 0.0, %v1798
        %v1800 = vpop.f32.mrb[0].mxu0
        %v1801 = vadd.f32 0.0, %v1800
        %v1802 = vpop.f32.mrb[0].mxu0
        %v1803 = vadd.f32 0.0, %v1802
        %v1804 = vpop.f32.mrb[0].mxu0
        %v1805 = vadd.f32 0.0, %v1804
        %1806 = vmatprep.mubr.bf16.mxu0 %v1381
        %1807 = vmatmul.mubr.bf16.gmra.mrb[0].mxu0 %v817
        %v1808 = vpop.f32.mrb[0].mxu0
        %v1809 = vadd.f32 0.0, %v1808
        %v1810 = vpop.f32.mrb[0].mxu0
        %v1811 = vadd.f32 0.0, %v1810
        %v1812 = vpop.f32.mrb[0].mxu0
        %v1813 = vadd.f32 0.0, %v1812
        %v1814 = vpop.f32.mrb[0].mxu0
        %v1815 = vadd.f32 0.0, %v1814
        %1816 = vmatprep.mubr.bf16.mxu0 %v1384
        %1817 = vmatmul.mubr.bf16.gmra.mrb[0].mxu0 %v819
        %v1818 = vpop.f32.mrb[0].mxu0
        %v1819 = vadd.f32 0.0, %v1818
        %v1820 = vpop.f32.mrb[0].mxu0
        %v1821 = vadd.f32 0.0, %v1820
        %v1822 = vpop.f32.mrb[0].mxu0
        %v1823 = vadd.f32 0.0, %v1822
        %v1824 = vpop.f32.mrb[0].mxu0
        %v1825 = vadd.f32 0.0, %v1824
        %1826 = vmatprep.mubr.bf16.mxu0 %v1387
        %1827 = vmatmul.mubr.bf16.gmra.mrb[0].mxu0 %v821
        %v1828 = vpop.f32.mrb[0].mxu0
        %v1829 = vadd.f32 0.0, %v1828
        %v1830 = vpop.f32.mrb[0].mxu0
        %v1831 = vadd.f32 0.0, %v1830
        %v1832 = vpop.f32.mrb[0].mxu0
        %v1833 = vadd.f32 0.0, %v1832
        %v1834 = vpop.f32.mrb[0].mxu0
        %v1835 = vadd.f32 0.0, %v1834
        %1836 = vmatprep.mubr.bf16.mxu0 %v1390
        %1837 = vmatmul.mubr.bf16.gmra.mrb[0].mxu0 %v823
        %v1838 = vpop.f32.mrb[0].mxu0
        %v1839 = vadd.f32 0.0, %v1838
        %v1840 = vpop.f32.mrb[0].mxu0
        %v1841 = vadd.f32 0.0, %v1840
        %v1842 = vpop.f32.mrb[0].mxu0
        %v1843 = vadd.f32 0.0, %v1842
        %v1844 = vpop.f32.mrb[0].mxu0
        %v1845 = vadd.f32 0.0, %v1844
        %1846 = vmatprep.mubr.bf16.mxu0 %v1393
        %1847 = vmatmul.mubr.bf16.gmra.mrb[0].mxu0 %v825
        %v1848 = vpop.f32.mrb[0].mxu0
        %v1849 = vadd.f32 0.0, %v1848
        %v1850 = vpop.f32.mrb[0].mxu0
        %v1851 = vadd.f32 0.0, %v1850
        %v1852 = vpop.f32.mrb[0].mxu0
        %v1853 = vpop.f32.mrb[0].mxu0
        %1854 = vdwg.mxu0
        %1855 = vmatprep.subr.bf16.mxu0 %v1196
        %1856 = vmatpush1.bf16.msra.mxu0 %v1195
        %1857 = vmatprep.subr.bf16.mxu0 %v1206
        %1858 = vmatpush1.bf16.msra.mxu0 %v1205
        %1859 = vmatprep.subr.bf16.mxu0 %v1216
        %1860 = vmatpush1.bf16.msra.mxu0 %v1215
        %1861 = vmatprep.subr.bf16.mxu0 %v1226
        %1862 = vmatpush1.bf16.msra.mxu0 %v1225
        %1863 = vmatprep.subr.bf16.mxu0 %v1236
        %1864 = vmatpush1.bf16.msra.mxu0 %v1235
        %1865 = vmatprep.subr.bf16.mxu0 %v1246
        %1866 = vmatpush1.bf16.msra.mxu0 %v1245
        %1867 = vmatprep.subr.bf16.mxu0 %v1256
        %1868 = vmatpush1.bf16.msra.mxu0 %v1255
        %1869 = vmatprep.subr.bf16.mxu0 %v1266
        %1870 = vmatpush1.bf16.msra.mxu0 %v1265
        %1871 = vmatprep.subr.bf16.mxu0 %v1276
        %1872 = vmatpush1.bf16.msra.mxu0 %v1275
        %1873 = vmatprep.subr.bf16.mxu0 0
        %1874 = vmatpush1.bf16.msra.mxu0 0
        %1875 = vmatprep.subr.bf16.mxu0 0
        %1876 = vmatpush1.bf16.msra.mxu0 0
        %1877 = vmatprep.subr.bf16.mxu0 0
        %1878 = vmatpush1.bf16.msra.mxu0 0
        %1879 = vmatprep.subr.bf16.mxu0 0
        %1880 = vmatpush1.bf16.msra.mxu0 0
        %1881 = vmatprep.subr.bf16.mxu0 0
        %1882 = vmatpush1.bf16.msra.mxu0 0
        %1883 = vmatprep.subr.bf16.mxu0 0
        %1884 = vmatpush1.bf16.msra.mxu0 0
        %1885 = vmatprep.subr.bf16.mxu0 0
        %1886 = vmatpush1.bf16.msra.mxu0 0
        %1887 = vmatprep.mubr.bf16.mxu0 %v1369
        %1888 = vmatmul.mubr.bf16.gmra.mrb[0].mxu0 %v809
        %v1889 = vpop.f32.mrb[0].mxu0
        %v1890 = vpop.f32.mrb[0].mxu0
        %v1891 = vpop.f32.mrb[0].mxu0
        %v1892 = vpop.f32.mrb[0].mxu0
        %1893 = vmatprep.mubr.bf16.mxu0 %v1372
        %1894 = vmatmul.mubr.bf16.gmra.mrb[0].mxu0 %v811
        %v1895 = vpop.f32.mrb[0].mxu0
        %v1896 = vpop.f32.mrb[0].mxu0
        %v1897 = vpop.f32.mrb[0].mxu0
        %v1898 = vpop.f32.mrb[0].mxu0
        %1899 = vmatprep.mubr.bf16.mxu0 %v1375
        %1900 = vmatmul.mubr.bf16.gmra.mrb[0].mxu0 %v813
        %v1901 = vpop.f32.mrb[0].mxu0
        %v1902 = vadd.f32 0.0, %v1901
        %v1903 = vpop.f32.mrb[0].mxu0
        %v1904 = vadd.f32 0.0, %v1903
        %v1905 = vpop.f32.mrb[0].mxu0
        %v1906 = vadd.f32 0.0, %v1905
        %v1907 = vpop.f32.mrb[0].mxu0
        %v1908 = vadd.f32 0.0, %v1907
        %1909 = vmatprep.mubr.bf16.mxu0 %v1378
        %1910 = vmatmul.mubr.bf16.gmra.mrb[0].mxu0 %v815
        %v1911 = vpop.f32.mrb[0].mxu0
        %v1912 = vadd.f32 0.0, %v1911
        %v1913 = vpop.f32.mrb[0].mxu0
        %v1914 = vadd.f32 0.0, %v1913
        %v1915 = vpop.f32.mrb[0].mxu0
        %v1916 = vadd.f32 0.0, %v1915
        %v1917 = vpop.f32.mrb[0].mxu0
        %v1918 = vadd.f32 0.0, %v1917
        %1919 = vmatprep.mubr.bf16.mxu0 %v1381
        %1920 = vmatmul.mubr.bf16.gmra.mrb[0].mxu0 %v817
        %v1921 = vpop.f32.mrb[0].mxu0
        %v1922 = vadd.f32 0.0, %v1921
        %v1923 = vpop.f32.mrb[0].mxu0
        %v1924 = vadd.f32 0.0, %v1923
        %v1925 = vpop.f32.mrb[0].mxu0
        %v1926 = vadd.f32 0.0, %v1925
        %v1927 = vpop.f32.mrb[0].mxu0
        %v1928 = vadd.f32 0.0, %v1927
        %1929 = vmatprep.mubr.bf16.mxu0 %v1384
        %1930 = vmatmul.mubr.bf16.gmra.mrb[0].mxu0 %v819
        %v1931 = vpop.f32.mrb[0].mxu0
        %v1932 = vadd.f32 0.0, %v1931
        %v1933 = vpop.f32.mrb[0].mxu0
        %v1934 = vadd.f32 0.0, %v1933
        %v1935 = vpop.f32.mrb[0].mxu0
        %v1936 = vadd.f32 0.0, %v1935
        %v1937 = vpop.f32.mrb[0].mxu0
        %v1938 = vadd.f32 0.0, %v1937
        %1939 = vmatprep.mubr.bf16.mxu0 %v1387
        %1940 = vmatmul.mubr.bf16.gmra.mrb[0].mxu0 %v821
        %v1941 = vpop.f32.mrb[0].mxu0
        %v1942 = vadd.f32 0.0, %v1941
        %v1943 = vpop.f32.mrb[0].mxu0
        %v1944 = vadd.f32 0.0, %v1943
        %v1945 = vpop.f32.mrb[0].mxu0
        %v1946 = vadd.f32 0.0, %v1945
        %v1947 = vpop.f32.mrb[0].mxu0
        %v1948 = vadd.f32 0.0, %v1947
        %1949 = vmatprep.mubr.bf16.mxu0 %v1390
        %1950 = vmatmul.mubr.bf16.gmra.mrb[0].mxu0 %v823
        %v1951 = vpop.f32.mrb[0].mxu0
        %v1952 = vadd.f32 0.0, %v1951
        %v1953 = vpop.f32.mrb[0].mxu0
        %v1954 = vadd.f32 0.0, %v1953
        %v1955 = vpop.f32.mrb[0].mxu0
        %v1956 = vadd.f32 0.0, %v1955
        %v1957 = vpop.f32.mrb[0].mxu0
        %v1958 = vadd.f32 0.0, %v1957
        %1959 = vmatprep.mubr.bf16.mxu0 %v1393
        %1960 = vmatmul.mubr.bf16.gmra.mrb[0].mxu0 %v825
        %v1961 = vpop.f32.mrb[0].mxu0
        %v1962 = vadd.f32 0.0, %v1961
        %v1963 = vpop.f32.mrb[0].mxu0
        %v1964 = vadd.f32 0.0, %v1963
        %v1965 = vpop.f32.mrb[0].mxu0
        %v1966 = vadd.f32 0.0, %v1965
        %v1967 = vpop.f32.mrb[0].mxu0
        %v1968 = vadd.f32 0.0, %v1967
        %1969 = vdwg.mxu0
        %v1970 = vadd.f32 %v1430, %v1547
        %v1971 = vadd.f32 %v1432, %v1549
        %v1972 = vadd.f32 %v1434, %v1553
        %v1973 = vadd.f32 %v1436, %v1555
        %v1974 = vadd.f32 %v1440, %v1557
        %v1975 = vadd.f32 %v1442, %v1559
        %v1976 = vadd.f32 %v1444, %v1563
        %v1977 = vadd.f32 %v1446, %v1565
        %v1978 = vadd.f32 %v1450, %v1567
        %v1979 = vadd.f32 %v1452, %v1569
        %v1980 = vadd.f32 %v1454, %v1573
        %v1981 = vadd.f32 %v1456, %v1575
        %v1982 = vadd.f32 %v1460, %v1577
        %v1983 = vadd.f32 %v1462, %v1579
        %v1984 = vadd.f32 %v1464, %v1583
        %v1985 = vadd.f32 %v1466, %v1585
        %v1986 = vadd.f32 %v1470, %v1587
        %v1987 = vadd.f32 %v1472, %v1589
        %v1988 = vadd.f32 %v1474, %v1593
        %v1989 = vadd.f32 %v1476, %v1595
        %v1990 = vadd.f32 %v1480, %v1597
        %v1991 = vadd.f32 %v1482, %v1599
        %v1992 = vadd.f32 %v1484, %v1603
        %v1993 = vadd.f32 %v1486, %v1605
        %v1994 = vadd.f32 %v1490, %v1607
        %v1995 = vadd.f32 %v1492, %v1609
        %v1996 = vadd.f32 %v1494, %v1613
        %v1997 = vadd.f32 %v1496, %v1615
        %v1998 = vadd.f32 %v1970, %v1666
        %v1999 = vadd.f32 %v1971, %v1668
        %v2000 = vadd.f32 %v1972, %v1670
        %v2001 = vadd.f32 %v1973, %v1672
        %v2002 = vadd.f32 %v1974, %v1676
        %v2003 = vadd.f32 %v1975, %v1678
        %v2004 = vadd.f32 %v1976, %v1680
        %v2005 = vadd.f32 %v1977, %v1682
        %v2006 = vadd.f32 %v1978, %v1686
        %v2007 = vadd.f32 %v1979, %v1688
        %v2008 = vadd.f32 %v1980, %v1690
        %v2009 = vadd.f32 %v1981, %v1692
        %v2010 = vadd.f32 %v1982, %v1696
        %v2011 = vadd.f32 %v1983, %v1698
        %v2012 = vadd.f32 %v1984, %v1700
        %v2013 = vadd.f32 %v1985, %v1702
        %v2014 = vadd.f32 %v1986, %v1706
        %v2015 = vadd.f32 %v1987, %v1708
        %v2016 = vadd.f32 %v1988, %v1710
        %v2017 = vadd.f32 %v1989, %v1712
        %v2018 = vadd.f32 %v1990, %v1716
        %v2019 = vadd.f32 %v1991, %v1718
        %v2020 = vadd.f32 %v1992, %v1720
        %v2021 = vadd.f32 %v1993, %v1722
        %v2022 = vadd.f32 %v1994, %v1726
        %v2023 = vadd.f32 %v1995, %v1728
        %v2024 = vadd.f32 %v1996, %v1730
        %v2025 = vadd.f32 %v1997, %v1732
        %v2026 = vadd.f32 %v1998, %v1783
        %v2027 = vadd.f32 %v1999, %v1785
        %v2028 = vadd.f32 %v2000, %v1789
        %v2029 = vadd.f32 %v2001, %v1791
        %v2030 = vadd.f32 %v2002, %v1793
        %v2031 = vadd.f32 %v2003, %v1795
        %v2032 = vadd.f32 %v2004, %v1799
        %v2033 = vadd.f32 %v2005, %v1801
        %v2034 = vadd.f32 %v2006, %v1803
        %v2035 = vadd.f32 %v2007, %v1805
        %v2036 = vadd.f32 %v2008, %v1809
        %v2037 = vadd.f32 %v2009, %v1811
        %v2038 = vadd.f32 %v2010, %v1813
        %v2039 = vadd.f32 %v2011, %v1815
        %v2040 = vadd.f32 %v2012, %v1819
        %v2041 = vadd.f32 %v2013, %v1821
        %v2042 = vadd.f32 %v2014, %v1823
        %v2043 = vadd.f32 %v2015, %v1825
        %v2044 = vadd.f32 %v2016, %v1829
        %v2045 = vadd.f32 %v2017, %v1831
        %v2046 = vadd.f32 %v2018, %v1833
        %v2047 = vadd.f32 %v2019, %v1835
        %v2048 = vadd.f32 %v2020, %v1839
        %v2049 = vadd.f32 %v2021, %v1841
        %v2050 = vadd.f32 %v2022, %v1843
        %v2051 = vadd.f32 %v2023, %v1845
        %v2052 = vadd.f32 %v2024, %v1849
        %v2053 = vadd.f32 %v2025, %v1851
        %v2054 = vadd.f32 %v2026, %v1902
        %v2055 = vadd.f32 %v2027, %v1904
        %v2056 = vadd.f32 %v2028, %v1906
        %v2057 = vadd.f32 %v2029, %v1908
        %v2058 = vadd.f32 %v2030, %v1912
        %v2059 = vadd.f32 %v2031, %v1914
        %v2060 = vadd.f32 %v2032, %v1916
        %v2061 = vadd.f32 %v2033, %v1918
        %v2062 = vadd.f32 %v2034, %v1922
        %v2063 = vadd.f32 %v2035, %v1924
        %v2064 = vadd.f32 %v2036, %v1926
        %v2065 = vadd.f32 %v2037, %v1928
        %v2066 = vadd.f32 %v2038, %v1932
        %v2067 = vadd.f32 %v2039, %v1934
        %v2068 = vadd.f32 %v2040, %v1936
        %v2069 = vadd.f32 %v2041, %v1938
        %v2070 = vadd.f32 %v2042, %v1942
        %v2071 = vadd.f32 %v2043, %v1944
        %v2072 = vadd.f32 %v2044, %v1946
        %v2073 = vadd.f32 %v2045, %v1948
        %v2074 = vadd.f32 %v2046, %v1952
        %v2075 = vadd.f32 %v2047, %v1954
        %v2076 = vadd.f32 %v2048, %v1956
        %v2077 = vadd.f32 %v2049, %v1958
        %v2078 = vadd.f32 %v2050, %v1962
        %v2079 = vadd.f32 %v2051, %v1964
        %v2080 = vadd.f32 %v2052, %v1966
        %v2081 = vadd.f32 %v2053, %v1968
        %v2082 = vld [vmem:[%s4] sm:$0x3]
        %v2084 = vlaneseq
        %v2085 = vshrl.u32 %v2084, 7
        %v2086 = vsub.s32 0, %v2085
        %v2087 = vrot.slane %v2082, %v2086
        %v2088 = vlaneseq
        %v2089 = vshrl.u32 %v2088, 7
        %v2090 = vsub.s32 1, %v2089
        %v2091 = vrot.slane %v2082, %v2090
        %v2094 = vadd.f32 %v2054, %v2087
        %v2095 = vadd.f32 %v2055, %v2091
        %v2096 = vadd.f32 %v2056, %v2087
        %v2097 = vadd.f32 %v2057, %v2091
        %v2098 = vadd.f32 %v2058, %v2087
        %v2099 = vadd.f32 %v2059, %v2091
        %v2100 = vadd.f32 %v2060, %v2087
        %v2101 = vadd.f32 %v2061, %v2091
        %v2102 = vadd.f32 %v2062, %v2087
        %v2103 = vadd.f32 %v2063, %v2091
        %v2104 = vadd.f32 %v2064, %v2087
        %v2105 = vadd.f32 %v2065, %v2091
        %v2106 = vadd.f32 %v2066, %v2087
        %v2107 = vadd.f32 %v2067, %v2091
        %v2108 = vadd.f32 %v2068, %v2087
        %v2109 = vadd.f32 %v2069, %v2091
        %v2110 = vadd.f32 %v2070, %v2087
        %v2111 = vadd.f32 %v2071, %v2091
        %v2112 = vadd.f32 %v2072, %v2087
        %v2113 = vadd.f32 %v2073, %v2091
        %v2114 = vadd.f32 %v2074, %v2087
        %v2115 = vadd.f32 %v2075, %v2091
        %v2116 = vadd.f32 %v2076, %v2087
        %v2117 = vadd.f32 %v2077, %v2091
        %v2118 = vadd.f32 %v2078, %v2087
        %v2119 = vadd.f32 %v2079, %v2091
        %v2120 = vadd.f32 %v2080, %v2087
        %v2121 = vadd.f32 %v2081, %v2091
        %vm2122 = vcmp.ge.f32.partialorder %v2094, 0.0
        %vm2123 = vcmp.ge.f32.partialorder %v2095, 0.0
        %vm2124 = vcmp.ge.f32.partialorder %v2096, 0.0
        %vm2125 = vcmp.ge.f32.partialorder %v2097, 0.0
        %vm2126 = vcmp.ge.f32.partialorder %v2098, 0.0
        %vm2127 = vcmp.ge.f32.partialorder %v2099, 0.0
        %vm2128 = vcmp.ge.f32.partialorder %v2100, 0.0
        %vm2129 = vcmp.ge.f32.partialorder %v2101, 0.0
        %vm2130 = vcmp.ge.f32.partialorder %v2102, 0.0
        %vm2131 = vcmp.ge.f32.partialorder %v2103, 0.0
        %vm2132 = vcmp.ge.f32.partialorder %v2104, 0.0
        %vm2133 = vcmp.ge.f32.partialorder %v2105, 0.0
        %vm2134 = vcmp.ge.f32.partialorder %v2106, 0.0
        %vm2135 = vcmp.ge.f32.partialorder %v2107, 0.0
        %vm2136 = vcmp.ge.f32.partialorder %v2108, 0.0
        %vm2137 = vcmp.ge.f32.partialorder %v2109, 0.0
        %vm2138 = vcmp.ge.f32.partialorder %v2110, 0.0
        %vm2139 = vcmp.ge.f32.partialorder %v2111, 0.0
        %vm2140 = vcmp.ge.f32.partialorder %v2112, 0.0
        %vm2141 = vcmp.ge.f32.partialorder %v2113, 0.0
        %vm2142 = vcmp.ge.f32.partialorder %v2114, 0.0
        %vm2143 = vcmp.ge.f32.partialorder %v2115, 0.0
        %vm2144 = vcmp.ge.f32.partialorder %v2116, 0.0
        %vm2145 = vcmp.ge.f32.partialorder %v2117, 0.0
        %vm2146 = vcmp.ge.f32.partialorder %v2118, 0.0
        %vm2147 = vcmp.ge.f32.partialorder %v2119, 0.0
        %vm2148 = vcmp.ge.f32.partialorder %v2120, 0.0
        %vm2149 = vcmp.ge.f32.partialorder %v2121, 0.0
        %v2150 = vmul.f32 %v2094, 0.01
        %v2151 = vmul.f32 %v2095, 0.01
        %v2152 = vmul.f32 %v2096, 0.01
        %v2153 = vmul.f32 %v2097, 0.01
        %v2154 = vmul.f32 %v2098, 0.01
        %v2155 = vmul.f32 %v2099, 0.01
        %v2156 = vmul.f32 %v2100, 0.01
        %v2157 = vmul.f32 %v2101, 0.01
        %v2158 = vmul.f32 %v2102, 0.01
        %v2159 = vmul.f32 %v2103, 0.01
        %v2160 = vmul.f32 %v2104, 0.01
        %v2161 = vmul.f32 %v2105, 0.01
        %v2162 = vmul.f32 %v2106, 0.01
        %v2163 = vmul.f32 %v2107, 0.01
        %v2164 = vmul.f32 %v2108, 0.01
        %v2165 = vmul.f32 %v2109, 0.01
        %v2166 = vmul.f32 %v2110, 0.01
        %v2167 = vmul.f32 %v2111, 0.01
        %v2168 = vmul.f32 %v2112, 0.01
        %v2169 = vmul.f32 %v2113, 0.01
        %v2170 = vmul.f32 %v2114, 0.01
        %v2171 = vmul.f32 %v2115, 0.01
        %v2172 = vmul.f32 %v2116, 0.01
        %v2173 = vmul.f32 %v2117, 0.01
        %v2174 = vmul.f32 %v2118, 0.01
        %v2175 = vmul.f32 %v2119, 0.01
        %v2176 = vmul.f32 %v2120, 0.01
        %v2177 = vmul.f32 %v2121, 0.01
        %v2178 = vsel %vm2122, %v2094, %v2150
        %v2179 = vsel %vm2123, %v2095, %v2151
        %v2180 = vsel %vm2124, %v2096, %v2152
        %v2181 = vsel %vm2125, %v2097, %v2153
        %v2182 = vsel %vm2126, %v2098, %v2154
        %v2183 = vsel %vm2127, %v2099, %v2155
        %v2184 = vsel %vm2128, %v2100, %v2156
        %v2185 = vsel %vm2129, %v2101, %v2157
        %v2186 = vsel %vm2130, %v2102, %v2158
        %v2187 = vsel %vm2131, %v2103, %v2159
        %v2188 = vsel %vm2132, %v2104, %v2160
        %v2189 = vsel %vm2133, %v2105, %v2161
        %v2190 = vsel %vm2134, %v2106, %v2162
        %v2191 = vsel %vm2135, %v2107, %v2163
        %v2192 = vsel %vm2136, %v2108, %v2164
        %v2193 = vsel %vm2137, %v2109, %v2165
        %v2194 = vsel %vm2138, %v2110, %v2166
        %v2195 = vsel %vm2139, %v2111, %v2167
        %v2196 = vsel %vm2140, %v2112, %v2168
        %v2197 = vsel %vm2141, %v2113, %v2169
        %v2198 = vsel %vm2142, %v2114, %v2170
        %v2199 = vsel %vm2143, %v2115, %v2171
        %v2200 = vsel %vm2144, %v2116, %v2172
        %v2201 = vsel %vm2145, %v2117, %v2173
        %v2202 = vsel %vm2146, %v2118, %v2174
        %v2203 = vsel %vm2147, %v2119, %v2175
        %v2204 = vsel %vm2148, %v2120, %v2176
        %v2205 = vsel %vm2149, %v2121, %v2177
        %v2206 = vpack.c.bf16 %v2180, %v2178
        %v2207 = vpack.c.bf16 %v2181, %v2179
        %v2208 = vpack.c.bf16 %v2184, %v2182
        %v2209 = vpack.c.bf16 %v2185, %v2183
        %v2210 = vpack.c.bf16 %v2188, %v2186
        %v2211 = vpack.c.bf16 %v2189, %v2187
        %v2212 = vpack.c.bf16 %v2192, %v2190
        %v2213 = vpack.c.bf16 %v2193, %v2191
        %v2214 = vpack.c.bf16 %v2196, %v2194
        %v2215 = vpack.c.bf16 %v2197, %v2195
        %v2216 = vpack.c.bf16 %v2200, %v2198
        %v2217 = vpack.c.bf16 %v2201, %v2199
        %v2218 = vpack.c.bf16 %v2204, %v2202
        %v2219 = vpack.c.bf16 %v2205, %v2203
        %v2220 = vld [vmem:[#allocation5] sm:$0xff]
        %v2221 = vld [vmem:[#allocation5 + $0x8] sm:$0xff]
        %v2222 = vld [vmem:[#allocation5 + $0x10] sm:$0xff]
        %v2223 = vld [vmem:[#allocation5 + $0x18] sm:$0xff]
        %v2224 = vld [vmem:[#allocation5 + $0x20] sm:$0xff]
        %v2225 = vld [vmem:[#allocation5 + $0x28] sm:$0xff]
        %v2226 = vld [vmem:[#allocation5 + $0x30] sm:$0xff]
        %v2227 = vld [vmem:[#allocation5 + $0x38] sm:$0xff]
        %v2228 = vld [vmem:[#allocation5 + $0x40] sm:$0xff]
        %v2229 = vld [vmem:[#allocation5 + $0x48] sm:$0xff]
        %v2230 = vld [vmem:[#allocation5 + $0x50] sm:$0xff]
        %v2231 = vld [vmem:[#allocation5 + $0x58] sm:$0xff]
        %v2232 = vld [vmem:[#allocation5 + $0x60] sm:$0xff]
        %v2233 = vld [vmem:[#allocation5 + $0x68] sm:$0xff]
        %v2234 = vld [vmem:[#allocation5 + $0x70] sm:$0xff]
        %v2235 = vld [vmem:[#allocation5 + $0x78] sm:$0xff]
        %v2236 = vld [vmem:[#allocation5 + $0x80] sm:$0xff]
        %v2237 = vld [vmem:[#allocation5 + $0x88] sm:$0xff]
        %v2238 = vld [vmem:[#allocation5 + $0x90] sm:$0xff]
        %v2239 = vld [vmem:[#allocation5 + $0x98] sm:$0xff]
        %v2240 = vld [vmem:[#allocation5 + $0xa0] sm:$0xff]
        %v2241 = vld [vmem:[#allocation5 + $0xa8] sm:$0xff]
        %v2242 = vld [vmem:[#allocation5 + $0xb0] sm:$0xff]
        %v2243 = vld [vmem:[#allocation5 + $0xb8] sm:$0xff]
        %v2244 = vld [vmem:[#allocation5 + $0xc0] sm:$0xff]
        %v2245 = vld [vmem:[#allocation5 + $0xc8] sm:$0xff]
        %v2246 = vld [vmem:[#allocation5 + $0xd0] sm:$0xff]
        %v2247 = vld [vmem:[#allocation5 + $0xd8] sm:$0xff]
        %v2276 = vunpack.c.l.b16 %v2220
        %v2277 = vunpack.c.h.b16 %v2220
        %v2278 = vunpack.c.l.b16 %v2221
        %v2279 = vunpack.c.h.b16 %v2221
        %v2280 = vunpack.c.l.b16 %v2222
        %v2281 = vunpack.c.h.b16 %v2222
        %v2282 = vunpack.c.l.b16 %v2223
        %v2283 = vunpack.c.h.b16 %v2223
        %v2284 = vunpack.c.l.b16 %v2224
        %v2285 = vunpack.c.h.b16 %v2224
        %v2286 = vunpack.c.l.b16 %v2225
        %v2287 = vunpack.c.h.b16 %v2225
        %v2288 = vunpack.c.l.b16 %v2226
        %v2289 = vunpack.c.h.b16 %v2226
        %v2290 = vunpack.c.l.b16 %v2227
        %v2291 = vunpack.c.h.b16 %v2227
        %v2292 = vunpack.c.l.b16 %v2228
        %v2293 = vunpack.c.h.b16 %v2228
        %v2294 = vunpack.c.l.b16 %v2229
        %v2295 = vunpack.c.h.b16 %v2229
        %v2296 = vunpack.c.l.b16 %v2230
        %v2297 = vunpack.c.h.b16 %v2230
        %v2298 = vunpack.c.l.b16 %v2231
        %v2299 = vunpack.c.h.b16 %v2231
        %v2300 = vunpack.c.l.b16 %v2232
        %v2301 = vunpack.c.h.b16 %v2232
        %v2302 = vunpack.c.l.b16 %v2233
        %v2303 = vunpack.c.h.b16 %v2233
        %v2304 = vunpack.c.l.b16 %v2234
        %v2305 = vunpack.c.h.b16 %v2234
        %v2306 = vunpack.c.l.b16 %v2235
        %v2307 = vunpack.c.h.b16 %v2235
        %v2308 = vunpack.c.l.b16 %v2236
        %v2309 = vunpack.c.h.b16 %v2236
        %v2310 = vunpack.c.l.b16 %v2237
        %v2311 = vunpack.c.h.b16 %v2237
        %v2312 = vunpack.c.l.b16 %v2238
        %v2313 = vunpack.c.h.b16 %v2238
        %v2314 = vunpack.c.l.b16 %v2239
        %v2315 = vunpack.c.h.b16 %v2239
        %v2316 = vunpack.c.l.b16 %v2240
        %v2317 = vunpack.c.h.b16 %v2240
        %v2318 = vunpack.c.l.b16 %v2241
        %v2319 = vunpack.c.h.b16 %v2241
        %v2320 = vunpack.c.l.b16 %v2242
        %v2321 = vunpack.c.h.b16 %v2242
        %v2322 = vunpack.c.l.b16 %v2243
        %v2323 = vunpack.c.h.b16 %v2243
        %v2324 = vunpack.c.l.b16 %v2244
        %v2325 = vunpack.c.h.b16 %v2244
        %v2326 = vunpack.c.l.b16 %v2245
        %v2327 = vunpack.c.h.b16 %v2245
        %v2328 = vunpack.c.l.b16 %v2246
        %v2329 = vunpack.c.h.b16 %v2246
        %v2330 = vunpack.c.l.b16 %v2247
        %v2331 = vunpack.c.h.b16 %v2247
        %v2332 = vpack.c.b16 %v2278, %v2276
        %v2333 = vpack.c.b16 %v2279, %v2277
        %v2334 = vpack.c.b16 %v2282, %v2280
        %v2335 = vpack.c.b16 %v2283, %v2281
        %v2336 = vpack.c.b16 %v2286, %v2284
        %v2337 = vpack.c.b16 %v2287, %v2285
        %v2338 = vpack.c.b16 %v2290, %v2288
        %v2339 = vpack.c.b16 %v2291, %v2289
        %v2340 = vpack.c.b16 %v2294, %v2292
        %v2341 = vpack.c.b16 %v2295, %v2293
        %v2342 = vpack.c.b16 %v2298, %v2296
        %v2343 = vpack.c.b16 %v2299, %v2297
        %v2344 = vpack.c.b16 %v2302, %v2300
        %v2345 = vpack.c.b16 %v2303, %v2301
        %v2346 = vpack.c.b16 %v2306, %v2304
        %v2347 = vpack.c.b16 %v2307, %v2305
        %v2348 = vpack.c.b16 %v2310, %v2308
        %v2349 = vpack.c.b16 %v2311, %v2309
        %v2350 = vpack.c.b16 %v2314, %v2312
        %v2351 = vpack.c.b16 %v2315, %v2313
        %v2352 = vpack.c.b16 %v2318, %v2316
        %v2353 = vpack.c.b16 %v2319, %v2317
        %v2354 = vpack.c.b16 %v2322, %v2320
        %v2355 = vpack.c.b16 %v2323, %v2321
        %v2356 = vpack.c.b16 %v2326, %v2324
        %v2357 = vpack.c.b16 %v2327, %v2325
        %v2358 = vpack.c.b16 %v2330, %v2328
        %v2359 = vpack.c.b16 %v2331, %v2329
        %vm2388 = vcmask 785408
        %v2390 = vsel %vm2388, %v2207, 0
        %v2393 = vsel %vm2388, %v2209, 0
        %v2396 = vsel %vm2388, %v2211, 0
        %v2399 = vsel %vm2388, %v2213, 0
        %v2402 = vsel %vm2388, %v2215, 0
        %v2405 = vsel %vm2388, %v2217, 0
        %v2408 = vsel %vm2388, %v2219, 0
        %2410 = vmatprep.subr.bf16.mxu0 %v2333
        %2411 = vmatpush1.bf16.msra.mxu0 %v2332
        %2412 = vmatprep.subr.bf16.mxu0 %v2335
        %2413 = vmatpush1.bf16.msra.mxu0 %v2334
        %2414 = vmatprep.subr.bf16.mxu0 %v2337
        %2415 = vmatpush1.bf16.msra.mxu0 %v2336
        %2416 = vmatprep.subr.bf16.mxu0 %v2339
        %2417 = vmatpush1.bf16.msra.mxu0 %v2338
        %2418 = vmatprep.subr.bf16.mxu0 %v2341
        %2419 = vmatpush1.bf16.msra.mxu0 %v2340
        %2420 = vmatprep.subr.bf16.mxu0 %v2343
        %2421 = vmatpush1.bf16.msra.mxu0 %v2342
        %2422 = vmatprep.subr.bf16.mxu0 %v2345
        %2423 = vmatpush1.bf16.msra.mxu0 %v2344
        %2424 = vmatprep.subr.bf16.mxu0 %v2347
        %2425 = vmatpush1.bf16.msra.mxu0 %v2346
        %2426 = vmatprep.subr.bf16.mxu0 %v2349
        %2427 = vmatpush1.bf16.msra.mxu0 %v2348
        %2428 = vmatprep.subr.bf16.mxu0 %v2351
        %2429 = vmatpush1.bf16.msra.mxu0 %v2350
        %2430 = vmatprep.subr.bf16.mxu0 %v2353
        %2431 = vmatpush1.bf16.msra.mxu0 %v2352
        %2432 = vmatprep.subr.bf16.mxu0 %v2355
        %2433 = vmatpush1.bf16.msra.mxu0 %v2354
        %2434 = vmatprep.subr.bf16.mxu0 %v2357
        %2435 = vmatpush1.bf16.msra.mxu0 %v2356
        %2436 = vmatprep.subr.bf16.mxu0 %v2359
        %2437 = vmatpush1.bf16.msra.mxu0 %v2358
        %2438 = vmatprep.subr.bf16.mxu0 0
        %2439 = vmatpush1.bf16.msra.mxu0 0
        %2440 = vmatprep.subr.bf16.mxu0 0
        %2441 = vmatpush1.bf16.msra.mxu0 0
        %2442 = vmatprep.mubr.bf16.mxu0 %v2390
        %2443 = vmatmul.mubr.bf16.gmra.mrb[0].mxu0 %v2206
        %v2444 = vpop.f32.mrb[0].mxu0
        %v2445 = vadd.f32 0.0, %v2444
        %v2446 = vpop.f32.mrb[0].mxu0
        %v2447 = vadd.f32 0.0, %v2446
        %v2448 = vpop.f32.mrb[0].mxu0
        %v2449 = vadd.f32 0.0, %v2448
        %v2450 = vpop.f32.mrb[0].mxu0
        %v2451 = vadd.f32 0.0, %v2450
        %2452 = vmatprep.mubr.bf16.mxu0 %v2393
        %2453 = vmatmul.mubr.bf16.gmra.mrb[0].mxu0 %v2208
        %v2454 = vpop.f32.mrb[0].mxu0
        %v2455 = vadd.f32 0.0, %v2454
        %v2456 = vpop.f32.mrb[0].mxu0
        %v2457 = vadd.f32 0.0, %v2456
        %v2458 = vpop.f32.mrb[0].mxu0
        %v2459 = vadd.f32 0.0, %v2458
        %v2460 = vpop.f32.mrb[0].mxu0
        %v2461 = vadd.f32 0.0, %v2460
        %2462 = vmatprep.mubr.bf16.mxu0 %v2396
        %2463 = vmatmul.mubr.bf16.gmra.mrb[0].mxu0 %v2210
        %v2464 = vpop.f32.mrb[0].mxu0
        %v2465 = vadd.f32 0.0, %v2464
        %v2466 = vpop.f32.mrb[0].mxu0
        %v2467 = vadd.f32 0.0, %v2466
        %v2468 = vpop.f32.mrb[0].mxu0
        %v2469 = vadd.f32 0.0, %v2468
        %v2470 = vpop.f32.mrb[0].mxu0
        %v2471 = vadd.f32 0.0, %v2470
        %2472 = vmatprep.mubr.bf16.mxu0 %v2399
        %2473 = vmatmul.mubr.bf16.gmra.mrb[0].mxu0 %v2212
        %v2474 = vpop.f32.mrb[0].mxu0
        %v2475 = vadd.f32 0.0, %v2474
        %v2476 = vpop.f32.mrb[0].mxu0
        %v2477 = vadd.f32 0.0, %v2476
        %v2478 = vpop.f32.mrb[0].mxu0
        %v2479 = vadd.f32 0.0, %v2478
        %v2480 = vpop.f32.mrb[0].mxu0
        %v2481 = vadd.f32 0.0, %v2480
        %2482 = vmatprep.mubr.bf16.mxu0 %v2402
        %2483 = vmatmul.mubr.bf16.gmra.mrb[0].mxu0 %v2214
        %v2484 = vpop.f32.mrb[0].mxu0
        %v2485 = vadd.f32 0.0, %v2484
        %v2486 = vpop.f32.mrb[0].mxu0
        %v2487 = vadd.f32 0.0, %v2486
        %v2488 = vpop.f32.mrb[0].mxu0
        %v2489 = vadd.f32 0.0, %v2488
        %v2490 = vpop.f32.mrb[0].mxu0
        %v2491 = vadd.f32 0.0, %v2490
        %2492 = vmatprep.mubr.bf16.mxu0 %v2405
        %2493 = vmatmul.mubr.bf16.gmra.mrb[0].mxu0 %v2216
        %v2494 = vpop.f32.mrb[0].mxu0
        %v2495 = vadd.f32 0.0, %v2494
        %v2496 = vpop.f32.mrb[0].mxu0
        %v2497 = vadd.f32 0.0, %v2496
        %v2498 = vpop.f32.mrb[0].mxu0
        %v2499 = vadd.f32 0.0, %v2498
        %v2500 = vpop.f32.mrb[0].mxu0
        %v2501 = vadd.f32 0.0, %v2500
        %2502 = vmatprep.mubr.bf16.mxu0 %v2408
        %2503 = vmatmul.mubr.bf16.gmra.mrb[0].mxu0 %v2218
        %v2504 = vpop.f32.mrb[0].mxu0
        %v2505 = vadd.f32 0.0, %v2504
        %v2506 = vpop.f32.mrb[0].mxu0
        %v2507 = vadd.f32 0.0, %v2506
        %v2508 = vpop.f32.mrb[0].mxu0
        %v2509 = vadd.f32 0.0, %v2508
        %v2510 = vpop.f32.mrb[0].mxu0
        %v2511 = vadd.f32 0.0, %v2510
        %2512 = vdwg.mxu0
        %v2513 = vld [vmem:[#allocation7] sm:$0x3]
        %v2514 = vld [vmem:[#allocation7 + $0x2] sm:$0x3]
        %v2515 = vld [vmem:[#allocation7 + $0x4] sm:$0x3]
        %v2516 = vld [vmem:[#allocation7 + $0x6] sm:$0x3]
        %v2517 = vld [vmem:[#allocation7 + $0x8] sm:$0x3]
        %v2518 = vld [vmem:[#allocation7 + $0xa] sm:$0x3]
        %v2519 = vld [vmem:[#allocation7 + $0xc] sm:$0x3]
        %v2520 = vld [vmem:[#allocation7 + $0xe] sm:$0x3]
        %v2521 = vld [vmem:[#allocation7 + $0x10] sm:$0x3]
        %v2522 = vld [vmem:[#allocation7 + $0x12] sm:$0x3]
        %v2523 = vld [vmem:[#allocation7 + $0x14] sm:$0x3]
        %v2524 = vld [vmem:[#allocation7 + $0x16] sm:$0x3]
        %v2525 = vld [vmem:[#allocation7 + $0x18] sm:$0x3]
        %v2526 = vld [vmem:[#allocation7 + $0x1a] sm:$0x3]
        %v2541 = vlaneseq
        %v2542 = vshrl.u32 %v2541, 7
        %v2543 = vsub.s32 0, %v2542
        %v2544 = vrot.slane %v2513, %v2543
        %v2545 = vlaneseq
        %v2546 = vshrl.u32 %v2545, 7
        %v2547 = vsub.s32 1, %v2546
        %v2548 = vrot.slane %v2513, %v2547
        %v2549 = vlaneseq
        %v2550 = vshrl.u32 %v2549, 7
        %v2551 = vsub.s32 0, %v2550
        %v2552 = vrot.slane %v2514, %v2551
        %v2553 = vlaneseq
        %v2554 = vshrl.u32 %v2553, 7
        %v2555 = vsub.s32 1, %v2554
        %v2556 = vrot.slane %v2514, %v2555
        %v2557 = vlaneseq
        %v2558 = vshrl.u32 %v2557, 7
        %v2559 = vsub.s32 0, %v2558
        %v2560 = vrot.slane %v2515, %v2559
        %v2561 = vlaneseq
        %v2562 = vshrl.u32 %v2561, 7
        %v2563 = vsub.s32 1, %v2562
        %v2564 = vrot.slane %v2515, %v2563
        %v2565 = vlaneseq
        %v2566 = vshrl.u32 %v2565, 7
        %v2567 = vsub.s32 0, %v2566
        %v2568 = vrot.slane %v2516, %v2567
        %v2569 = vlaneseq
        %v2570 = vshrl.u32 %v2569, 7
        %v2571 = vsub.s32 1, %v2570
        %v2572 = vrot.slane %v2516, %v2571
        %v2573 = vlaneseq
        %v2574 = vshrl.u32 %v2573, 7
        %v2575 = vsub.s32 0, %v2574
        %v2576 = vrot.slane %v2517, %v2575
        %v2577 = vlaneseq
        %v2578 = vshrl.u32 %v2577, 7
        %v2579 = vsub.s32 1, %v2578
        %v2580 = vrot.slane %v2517, %v2579
        %v2581 = vlaneseq
        %v2582 = vshrl.u32 %v2581, 7
        %v2583 = vsub.s32 0, %v2582
        %v2584 = vrot.slane %v2518, %v2583
        %v2585 = vlaneseq
        %v2586 = vshrl.u32 %v2585, 7
        %v2587 = vsub.s32 1, %v2586
        %v2588 = vrot.slane %v2518, %v2587
        %v2589 = vlaneseq
        %v2590 = vshrl.u32 %v2589, 7
        %v2591 = vsub.s32 0, %v2590
        %v2592 = vrot.slane %v2519, %v2591
        %v2593 = vlaneseq
        %v2594 = vshrl.u32 %v2593, 7
        %v2595 = vsub.s32 1, %v2594
        %v2596 = vrot.slane %v2519, %v2595
        %v2597 = vlaneseq
        %v2598 = vshrl.u32 %v2597, 7
        %v2599 = vsub.s32 0, %v2598
        %v2600 = vrot.slane %v2520, %v2599
        %v2601 = vlaneseq
        %v2602 = vshrl.u32 %v2601, 7
        %v2603 = vsub.s32 1, %v2602
        %v2604 = vrot.slane %v2520, %v2603
        %v2605 = vlaneseq
        %v2606 = vshrl.u32 %v2605, 7
        %v2607 = vsub.s32 0, %v2606
        %v2608 = vrot.slane %v2521, %v2607
        %v2609 = vlaneseq
        %v2610 = vshrl.u32 %v2609, 7
        %v2611 = vsub.s32 1, %v2610
        %v2612 = vrot.slane %v2521, %v2611
        %v2613 = vlaneseq
        %v2614 = vshrl.u32 %v2613, 7
        %v2615 = vsub.s32 0, %v2614
        %v2616 = vrot.slane %v2522, %v2615
        %v2617 = vlaneseq
        %v2618 = vshrl.u32 %v2617, 7
        %v2619 = vsub.s32 1, %v2618
        %v2620 = vrot.slane %v2522, %v2619
        %v2621 = vlaneseq
        %v2622 = vshrl.u32 %v2621, 7
        %v2623 = vsub.s32 0, %v2622
        %v2624 = vrot.slane %v2523, %v2623
        %v2625 = vlaneseq
        %v2626 = vshrl.u32 %v2625, 7
        %v2627 = vsub.s32 1, %v2626
        %v2628 = vrot.slane %v2523, %v2627
        %v2629 = vlaneseq
        %v2630 = vshrl.u32 %v2629, 7
        %v2631 = vsub.s32 0, %v2630
        %v2632 = vrot.slane %v2524, %v2631
        %v2633 = vlaneseq
        %v2634 = vshrl.u32 %v2633, 7
        %v2635 = vsub.s32 1, %v2634
        %v2636 = vrot.slane %v2524, %v2635
        %v2637 = vlaneseq
        %v2638 = vshrl.u32 %v2637, 7
        %v2639 = vsub.s32 0, %v2638
        %v2640 = vrot.slane %v2525, %v2639
        %v2641 = vlaneseq
        %v2642 = vshrl.u32 %v2641, 7
        %v2643 = vsub.s32 1, %v2642
        %v2644 = vrot.slane %v2525, %v2643
        %v2645 = vlaneseq
        %v2646 = vshrl.u32 %v2645, 7
        %v2647 = vsub.s32 0, %v2646
        %v2648 = vrot.slane %v2526, %v2647
        %v2649 = vlaneseq
        %v2650 = vshrl.u32 %v2649, 7
        %v2651 = vsub.s32 1, %v2650
        %v2652 = vrot.slane %v2526, %v2651
        %v2681 = vmul.f32 %v2445, %v2544
        %v2682 = vmul.f32 %v2447, %v2548
        %v2683 = vmul.f32 %v2449, %v2552
        %v2684 = vmul.f32 %v2451, %v2556
        %v2685 = vmul.f32 %v2455, %v2560
        %v2686 = vmul.f32 %v2457, %v2564
        %v2687 = vmul.f32 %v2459, %v2568
        %v2688 = vmul.f32 %v2461, %v2572
        %v2689 = vmul.f32 %v2465, %v2576
        %v2690 = vmul.f32 %v2467, %v2580
        %v2691 = vmul.f32 %v2469, %v2584
        %v2692 = vmul.f32 %v2471, %v2588
        %v2693 = vmul.f32 %v2475, %v2592
        %v2694 = vmul.f32 %v2477, %v2596
        %v2695 = vmul.f32 %v2479, %v2600
        %v2696 = vmul.f32 %v2481, %v2604
        %v2697 = vmul.f32 %v2485, %v2608
        %v2698 = vmul.f32 %v2487, %v2612
        %v2699 = vmul.f32 %v2489, %v2616
        %v2700 = vmul.f32 %v2491, %v2620
        %v2701 = vmul.f32 %v2495, %v2624
        %v2702 = vmul.f32 %v2497, %v2628
        %v2703 = vmul.f32 %v2499, %v2632
        %v2704 = vmul.f32 %v2501, %v2636
        %v2705 = vmul.f32 %v2505, %v2640
        %v2706 = vmul.f32 %v2507, %v2644
        %v2707 = vmul.f32 %v2509, %v2648
        %v2708 = vmul.f32 %v2511, %v2652
        %v2709 = vadd.f32 %v2681, %v2683
        %v2710 = vadd.f32 %v2709, %v2685
        %v2711 = vadd.f32 %v2710, %v2687
        %v2712 = vadd.f32 %v2711, %v2689
        %v2713 = vadd.f32 %v2712, %v2691
        %v2714 = vadd.f32 %v2713, %v2693
        %v2715 = vadd.f32 %v2714, %v2695
        %v2716 = vadd.f32 %v2715, %v2697
        %v2717 = vadd.f32 %v2716, %v2699
        %v2718 = vadd.f32 %v2717, %v2701
        %v2719 = vadd.f32 %v2718, %v2703
        %v2720 = vadd.f32 %v2719, %v2705
        %v2721 = vadd.f32 %v2720, %v2707
        %v2722 = vsel %vm2388, %v2682, 0.0
        %v2723 = vsel %vm2388, %v2684, 0.0
        %v2724 = vadd.f32 %v2722, %v2723
        %v2725 = vsel %vm2388, %v2686, 0.0
        %v2726 = vadd.f32 %v2724, %v2725
        %v2727 = vsel %vm2388, %v2688, 0.0
        %v2728 = vadd.f32 %v2726, %v2727
        %v2729 = vsel %vm2388, %v2690, 0.0
        %v2730 = vadd.f32 %v2728, %v2729
        %v2731 = vsel %vm2388, %v2692, 0.0
        %v2732 = vadd.f32 %v2730, %v2731
        %v2733 = vsel %vm2388, %v2694, 0.0
        %v2734 = vadd.f32 %v2732, %v2733
        %v2735 = vsel %vm2388, %v2696, 0.0
        %v2736 = vadd.f32 %v2734, %v2735
        %v2737 = vsel %vm2388, %v2698, 0.0
        %v2738 = vadd.f32 %v2736, %v2737
        %v2739 = vsel %vm2388, %v2700, 0.0
        %v2740 = vadd.f32 %v2738, %v2739
        %v2741 = vsel %vm2388, %v2702, 0.0
        %v2742 = vadd.f32 %v2740, %v2741
        %v2743 = vsel %vm2388, %v2704, 0.0
        %v2744 = vadd.f32 %v2742, %v2743
        %v2745 = vsel %vm2388, %v2706, 0.0
        %v2746 = vadd.f32 %v2744, %v2745
        %v2747 = vsel %vm2388, %v2708, 0.0
        %v2748 = vadd.f32 %v2746, %v2747
        %v2749 = vld [vmem:[%s7] sm:$0xff]
        %v2750 = vld [vmem:[%s7 + $0x8] sm:$0xff]
        %v2751 = vld [vmem:[%s7 + $0x10] sm:$0xff]
        %v2752 = vld [vmem:[%s7 + $0x18] sm:$0xff]
        %v2753 = vld [vmem:[%s7 + $0x20] sm:$0xff]
        %v2754 = vld [vmem:[%s7 + $0x28] sm:$0xff]
        %v2755 = vld [vmem:[%s7 + $0x30] sm:$0xff]
        %v2756 = vld [vmem:[%s7 + $0x38] sm:$0xff]
        %v2757 = vld [vmem:[%s7 + $0x40] sm:$0xff]
        %v2758 = vld [vmem:[%s7 + $0x48] sm:$0xff]
        %v2759 = vld [vmem:[%s7 + $0x50] sm:$0xff]
        %v2760 = vld [vmem:[%s7 + $0x58] sm:$0xff]
        %v2761 = vld [vmem:[%s7 + $0x60] sm:$0xff]
        %v2762 = vld [vmem:[%s7 + $0x68] sm:$0xff]
        %v2763 = vld [vmem:[%s7 + $0x70] sm:$0xff]
        %v2764 = vld [vmem:[%s7 + $0x78] sm:$0xff]
        %v2765 = vld [vmem:[%s7 + $0x80] sm:$0xff]
        %v2766 = vld [vmem:[%s7 + $0x88] sm:$0xff]
        %v2767 = vld [vmem:[%s7 + $0x90] sm:$0xff]
        %v2768 = vld [vmem:[%s7 + $0x98] sm:$0xff]
        %v2769 = vld [vmem:[%s7 + $0xa0] sm:$0xff]
        %v2770 = vld [vmem:[%s7 + $0xa8] sm:$0xff]
        %v2771 = vld [vmem:[%s7 + $0xb0] sm:$0xff]
        %v2772 = vld [vmem:[%s7 + $0xb8] sm:$0xff]
        %v2773 = vld [vmem:[%s7 + $0xc0] sm:$0xff]
        %v2774 = vld [vmem:[%s7 + $0xc8] sm:$0xff]
        %v2775 = vld [vmem:[%s7 + $0xd0] sm:$0xff]
        %v2776 = vld [vmem:[%s7 + $0xd8] sm:$0xff]
        %v2777 = vld [vmem:[%s8] sm:$0x1]
        %v2779 = vlaneseq
        %v2780 = vshrl.u32 %v2779, 7
        %v2781 = vsub.s32 0, %v2780
        %v2782 = vrot.slane %v2777, %v2781
        %v2785 = vsel %vm2388, %v2748, 0
        %2787 = vmatprep.subr.mxu0 0.0
        %2788 = vmatpush1.msra.mxu0 %v2749
        %2789 = vmatprep.subr.mxu0 0.0
        %2790 = vmatpush1.msra.mxu0 %v2750
        %2791 = vmatprep.subr.mxu0 0.0
        %2792 = vmatpush1.msra.mxu0 %v2751
        %2793 = vmatprep.subr.mxu0 0.0
        %2794 = vmatpush1.msra.mxu0 %v2752
        %2795 = vmatprep.subr.mxu0 0.0
        %2796 = vmatpush1.msra.mxu0 %v2753
        %2797 = vmatprep.subr.mxu0 0.0
        %2798 = vmatpush1.msra.mxu0 %v2754
        %2799 = vmatprep.subr.mxu0 0.0
        %2800 = vmatpush1.msra.mxu0 %v2755
        %2801 = vmatprep.subr.mxu0 0.0
        %2802 = vmatpush1.msra.mxu0 %v2756
        %2803 = vmatprep.subr.mxu0 0.0
        %2804 = vmatpush1.msra.mxu0 %v2757
        %2805 = vmatprep.subr.mxu0 0.0
        %2806 = vmatpush1.msra.mxu0 %v2758
        %2807 = vmatprep.subr.mxu0 0.0
        %2808 = vmatpush1.msra.mxu0 %v2759
        %2809 = vmatprep.subr.mxu0 0.0
        %2810 = vmatpush1.msra.mxu0 %v2760
        %2811 = vmatprep.subr.mxu0 0.0
        %2812 = vmatpush1.msra.mxu0 %v2761
        %2813 = vmatprep.subr.mxu0 0.0
        %2814 = vmatpush1.msra.mxu0 %v2762
        %2815 = vmatprep.subr.mxu0 0.0
        %2816 = vmatpush1.msra.mxu0 %v2763
        %2817 = vmatprep.subr.mxu0 0.0
        %2818 = vmatpush1.msra.mxu0 %v2764
        %2819 = vmatprep.subr.mxu0 0.0
        %2820 = vmatpush1.msra.mxu0 %v2765
        %2821 = vmatprep.subr.mxu0 0.0
        %2822 = vmatpush1.msra.mxu0 %v2766
        %2823 = vmatprep.subr.mxu0 0.0
        %2824 = vmatpush1.msra.mxu0 %v2767
        %2825 = vmatprep.subr.mxu0 0.0
        %2826 = vmatpush1.msra.mxu0 %v2768
        %2827 = vmatprep.subr.mxu0 0.0
        %2828 = vmatpush1.msra.mxu0 %v2769
        %2829 = vmatprep.subr.mxu0 0.0
        %2830 = vmatpush1.msra.mxu0 %v2770
        %2831 = vmatprep.subr.mxu0 0.0
        %2832 = vmatpush1.msra.mxu0 %v2771
        %2833 = vmatprep.subr.mxu0 0.0
        %2834 = vmatpush1.msra.mxu0 %v2772
        %2835 = vmatprep.subr.mxu0 0.0
        %2836 = vmatpush1.msra.mxu0 %v2773
        %2837 = vmatprep.subr.mxu0 0.0
        %2838 = vmatpush1.msra.mxu0 %v2774
        %2839 = vmatprep.subr.mxu0 0.0
        %2840 = vmatpush1.msra.mxu0 %v2775
        %2841 = vmatprep.subr.mxu0 0.0
        %2842 = vmatpush1.msra.mxu0 %v2776
        %2843 = vmatprep.subr.mxu0 0.0
        %2844 = vmatpush1.msra.mxu0 0.0
        %2845 = vmatprep.subr.mxu0 0.0
        %2846 = vmatpush1.msra.mxu0 0.0
        %2847 = vmatprep.subr.mxu0 0.0
        %2848 = vmatpush1.msra.mxu0 0.0
        %2849 = vmatprep.subr.mxu0 0.0
        %2850 = vmatpush1.msra.mxu0 0.0
        %2851 = vmatprep.mubr.f32.mxu0 %v2785
        %2852 = vmatmul.mubr.f32.gmra.mrb[0].mxu0 %v2721
        %v2853 = vpop.f32.mrb[0].mxu0
        %v2854 = vadd.f32 %v2782, %v2853
        %v2855 = vpop.f32.mrb[0].mxu0
        %2856 = vdwg.mxu0
        %vm2857 = vcmask 261120
        %2858 = vst.msk [vmem:[%s370] sm:$0xff] %vm2857, %v2854
        %s2859 = sand.u32 %s227, 1
        %s2860 = scalar_lea.sflag [#allocation4], %s2859
        %s2861 = sand.u32 %s227, 1
        %s2862 = smul.addr %s2861, 8
        %s2863 = scalar_lea.vmem [#allocation8], %s2862
        // Predicated region
        $region69: #{tpu_custom_call.1} parent=55 // pred_check
          %p2864 = pneg %p237
        $region70: #{tpu_custom_call.1} parent=55 // pred_check_branch
          %2866 = sbr.rel (%p2864) target = $region72
        $region71: #{tpu_custom_call.1} parent=55 // pred_region
          %s2868 = ssub.s32 128, 128
          %2869 = vsyncadd %s2860, %s2868
          %s2870 = smul.addr %s25, 128
          %s2871 = scalar_lea.hbm %s9, %s2870
          %s2873 = sshll.u32 %s2863, 4
          %s2874 = int_to_ptr.vmem [resolvable:$true] %s2873
          %2876 = dma.vmem_to_hbm [thread:$0]  %s2874, 128, %s2871, %s2860
        $region72: #{tpu_custom_call.1} parent=55 // pred_fallthru
          _
      $region56: #{tpu_custom_call.1} parent=5 // pred_fallthru
        _
      %p2877 = scmp.le.s32.totalorder 2, %s20
      // Predicated region
      $region73: #{tpu_custom_call.1} parent=5 // pred_check
        %p2878 = pneg %p2877
      $region74: #{tpu_custom_call.1} parent=5 // pred_check_branch
        %2880 = sbr.rel (%p2878) target = $region76
      $region75: #{tpu_custom_call.1} parent=5 // pred_region
        %s2881 = ssub.s32 %s20, 2
        // Predicated region
        $region77: #{tpu_custom_call.1} parent=75 // pred_check
          %p2882 = pneg %p243
        $region78: #{tpu_custom_call.1} parent=75 // pred_check_branch
          %2884 = sbr.rel (%p2882) target = $region80
        $region79: #{tpu_custom_call.1} parent=75 // pred_region
          %s2885 = sand.u32 %s228, 1
          %s2886 = scalar_lea.sflag [#allocation4], %s2885
          %s2887 = sand.u32 %s228, 1
          %s2888 = smul.addr %s2887, 8
          %s2889 = scalar_lea.vmem [#allocation8], %s2888
          %2890 = dma.done %s2886, 128
        $region80: #{tpu_custom_call.1} parent=75 // pred_fallthru
          _
      $region76: #{tpu_custom_call.1} parent=5 // pred_fallthru
        _
    $region6: #{tpu_custom_call.1} parent=1 // loop_footer
      %s24 = sadd.s32 1, %s20
    $region7: #{tpu_custom_call.1} parent=1 // loop_footer_branch
      %19 = sbr.rel target = $region3
    $region8: #{tpu_custom_call.1} parent=1 // loop_exit
      _
    %2891 = vsyncpa [#allocation3], 1
    %s2892 = scalar_lea.sflag [#allocation3], 1
    %2893 = vsyncpa %s2892, 1
    %2894 = vsyncpa [#allocation6], 1
    %2895 = vsyncpa [#allocation4], 1
    %s2896 = scalar_lea.sflag [#allocation4], 1
    %2897 = vsyncpa %s2896, 1

</llo_original>
